<compile_context>
chip_gen: v5e
topology: v5e:2x2
jax: 0.10.0
libtpu: 0.0.40
codegen_flags: <defaults>
</compile_context>

<pallas_src>
import functools

import jax
import jax.numpy as jnp
from jax.experimental import pallas as pl
from jax.experimental.pallas import tpu as pltpu


def _double_conv_kernel(x_ref, w1_ref, b1_ref, w2t_ref, b2_ref, out_ref,
                        hpad_ref, *, tile_h, W, C_in, C_out):
    # x_ref:    (1, tile_h+4, W+2, C_in)  bf16 NHWC slab, zero-padded in H/W,
    #                                     2-row halo top/bottom.
    # w1_ref:   (3, 3*C_in, C_out)        bf16, conv1 weights split per dy.
    # b1_ref:   (1, C_out)                f32.
    # w2t_ref:  (3, C_out, 3*C_out)       bf16, conv2 weights (transposed) per dy.
    # b2_ref:   (C_out, 1)                f32.
    # out_ref:  (1, C_out, tile_h*W)      f32, channel-major, lane-dense store.
    # hpad_ref: VMEM (tile_h+2, W+2, C_out) bf16 scratch for conv1 output
    #           (conv2's W-padded input).
    f32 = jnp.float32
    th = tile_h
    t = pl.program_id(1)
    last_t = pl.num_programs(1) - 1

    x = x_ref[0]                                            # (th+4, W+2, C_in)

    # ---- conv1 over th+2 output rows (tile rows +/- 1 halo) ----------------
    # Three accumulated MXU matmuls with K = 3*C_in (dx taps concatenated on
    # lanes) instead of one (S, 9*C_in) im2col materialization.
    h_acc = None
    for dy in range(3):
        taps = jnp.concatenate(
            [x[dy:dy + th + 2, dx:dx + W, :] for dx in range(3)],
            axis=-1).reshape((th + 2) * W, 3 * C_in)         # bf16
        part = jnp.dot(taps, w1_ref[dy], preferred_element_type=f32)
        h_acc = part if h_acc is None else h_acc + part
    h = jnp.maximum(h_acc + b1_ref[...], 0.0)                # f32

    # ---- stage conv1 output into the W-padded VMEM buffer (bf16) -----------
    zcol = jnp.zeros((th + 2, 1, C_out), hpad_ref.dtype)
    hpad_ref[:, 0:1, :] = zcol
    hpad_ref[:, W + 1:W + 2, :] = zcol
    hpad_ref[:, 1:W + 1, :] = (
        h.reshape(th + 2, W, C_out).astype(hpad_ref.dtype))

    # conv2's H-halo rows at the image top/bottom are conv2's *zero padding*,
    # not conv1 evaluated outside the image -> zero them for boundary tiles.
    zrow = jnp.zeros((1, W + 2, C_out), hpad_ref.dtype)

    @pl.when(t == 0)
    def _():
        hpad_ref[0:1, :, :] = zrow

    @pl.when(t == last_t)
    def _():
        hpad_ref[th + 1:th + 2, :, :] = zrow

    # ---- conv2: channel-major NT matmuls -> (C_out, tile_h*W) --------------
    y_acc = None
    for dy in range(3):
        taps = jnp.concatenate(
            [hpad_ref[dy:dy + th, dx:dx + W, :] for dx in range(3)],
            axis=-1).reshape(th * W, 3 * C_out)              # bf16
        part = jax.lax.dot_general(
            w2t_ref[dy], taps,
            dimension_numbers=(((1,), (1,)), ((), ())),
            preferred_element_type=f32)                      # (C_out, th*W)
        y_acc = part if y_acc is None else y_acc + part
    out_ref[0] = jnp.maximum(y_acc + b2_ref[...], 0.0).astype(out_ref.dtype)


def _vmem_limit_bytes():
    """Per-generation VMEM budget (leave headroom for compiler scratch)."""
    try:
        cap = pltpu.get_tpu_info().vmem_capacity_bytes
    except Exception:
        cap = 64 * 1024 * 1024          # conservative (v7x-sized) fallback
    return int(min(int(cap * 0.8), 110 * 1024 * 1024))


def _choose_tile_h(H, W, C_in, C_out, budget):
    """Largest divisor of H whose per-tile footprint fits `budget` and whose
    output block minor dim (tile_h*W) is lane-tiled (multiple of 128) unless
    the whole image is a single tile."""
    bf16, f32 = 2, 4

    def tile_bytes(th):
        slab = (th + 4) * (W + 2) * C_in * bf16          # input block
        outb = C_out * th * W * f32                      # output block
        hpad = (th + 2) * (W + 2) * C_out * bf16         # scratch
        taps1 = (th + 2) * W * 3 * C_in * bf16
        acc1 = (th + 2) * W * C_out * f32
        taps2 = th * W * 3 * C_out * bf16
        acc2 = C_out * th * W * f32
        # double-buffered in/out blocks + conservative 2x on live patch values
        return 2 * (slab + outb) + hpad + 2 * (taps1 + taps2) + acc1 + acc2

    candidates = [d for d in range(H, 0, -1)
                  if H % d == 0 and (d == H or (d * W) % 128 == 0)]
    for th in candidates:
        if tile_bytes(th) <= budget:
            return th
    return candidates[-1]


def double_convolution(x_nchw, w1, b1, w2, b2, tile_h=None):
    """x_nchw: (B, C_in, H, W).  w1: (3,3,C_in,C_out), w2: (3,3,C_out,C_out),
    biases: (C_out,).  Returns (B, C_out, H, W)."""
    B, C_in, H, W = x_nchw.shape
    C_out = w1.shape[-1]

    vmem_limit = _vmem_limit_bytes()
    if tile_h is None:
        tile_h = _choose_tile_h(H, W, C_in, C_out, int(0.9 * vmem_limit))
    assert H % tile_h == 0, "tile_h must divide H"
    T = H // tile_h
    assert T == 1 or (tile_h * W) % 128 == 0, \
        "output block minor dim (tile_h*W) must be a multiple of 128"

    # NCHW -> NHWC (channels on lanes), bf16 MXU operands, zero-pad H by 2 and
    # W by 1, then gather overlapping H slabs with a 2-row halo per tile.
    x_nhwc = jnp.transpose(x_nchw, (0, 2, 3, 1)).astype(jnp.bfloat16)
    x_pad = jnp.pad(x_nhwc, ((0, 0), (2, 2), (1, 1), (0, 0)))
    rows = jnp.arange(T)[:, None] * tile_h + jnp.arange(tile_h + 4)[None, :]
    x_slabs = x_pad[:, rows, :, :]                   # (B, T, th+4, W+2, C_in)
    x_slabs = x_slabs.reshape(B * T, tile_h + 4, W + 2, C_in)

    # Per-dy weight layouts (tiny one-time HBM ops), bf16 for the MXU.
    w1_r = w1.astype(jnp.bfloat16).reshape(3, 3 * C_in, C_out)
    w2t_r = jnp.transpose(
        w2.astype(jnp.bfloat16).reshape(3, 3 * C_out, C_out), (0, 2, 1))
    b1_2d = b1.astype(jnp.float32).reshape(1, C_out)
    b2_2d = b2.astype(jnp.float32).reshape(C_out, 1)

    kernel = functools.partial(_double_conv_kernel, tile_h=tile_h, W=W,
                               C_in=C_in, C_out=C_out)

    out = pl.pallas_call(
        kernel,
        out_shape=jax.ShapeDtypeStruct((B, C_out, H * W), jnp.float32),
        grid_spec=pltpu.PrefetchScalarGridSpec(
            num_scalar_prefetch=0,
            grid=(B, T),
            in_specs=[
                pl.BlockSpec((1, tile_h + 4, W + 2, C_in),
                             lambda b, t: (b * T + t, 0, 0, 0)),
                # Weights/biases: constant index_maps -> resident across tiles.
                pl.BlockSpec((3, 3 * C_in, C_out), lambda b, t: (0, 0, 0)),
                pl.BlockSpec((1, C_out), lambda b, t: (0, 0)),
                pl.BlockSpec((3, C_out, 3 * C_out), lambda b, t: (0, 0, 0)),
                pl.BlockSpec((C_out, 1), lambda b, t: (0, 0)),
            ],
            out_specs=pl.BlockSpec((1, C_out, tile_h * W),
                                   lambda b, t: (b, 0, t)),
            scratch_shapes=[
                pltpu.VMEM((tile_h + 2, W + 2, C_out), jnp.bfloat16),
            ],
        ),
        compiler_params=pltpu.CompilerParams(
            dimension_semantics=("parallel", "parallel"),
            vmem_limit_bytes=vmem_limit),
    )(x_slabs, w1_r, b1_2d, w2t_r, b2_2d)

    # Channel-major (B, C_out, H*W) is already NCHW element order: free reshape.
    return out.reshape(B, C_out, H, W)


def _reference(x_nchw, w1, b1, w2, b2):
    """Pure-JAX f32 reference (lax.conv) for correctness checking."""
    def conv(x, w, b):
        w_oihw = jnp.transpose(w, (3, 2, 0, 1))  # (3,3,Ci,Co) -> OIHW
        y = jax.lax.conv_general_dilated(
            x, w_oihw, window_strides=(1, 1), padding=((1, 1), (1, 1)),
            dimension_numbers=('NCHW', 'OIHW', 'NCHW'))
        return jnp.maximum(y + b[None, :, None, None], 0.0)
    return conv(conv(x_nchw, w1, b1), w2, b2)


if __name__ == "__main__":
    B, C_in, C_out, H, W = 2, 4, 8, 16, 16

    key = jax.random.PRNGKey(0)
    kx, kw1, kb1, kw2, kb2 = jax.random.split(key, 5)

    x = jax.random.normal(kx, (B, C_in, H, W), dtype=jnp.float32)

    # Deterministic init mimicking PyTorch Conv2d default (+/- 1/sqrt(fan_in)).
    bound1 = 1.0 / (C_in * 9) ** 0.5
    w1 = jax.random.uniform(kw1, (3, 3, C_in, C_out), jnp.float32,
                            minval=-bound1, maxval=bound1)
    b1 = jax.random.uniform(kb1, (C_out,), jnp.float32,
                            minval=-bound1, maxval=bound1)
    bound2 = 1.0 / (C_out * 9) ** 0.5
    w2 = jax.random.uniform(kw2, (3, 3, C_out, C_out), jnp.float32,
                            minval=-bound2, maxval=bound2)
    b2 = jax.random.uniform(kb2, (C_out,), jnp.float32,
                            minval=-bound2, maxval=bound2)

    ref = jax.block_until_ready(_reference(x, w1, b1, w2, b2))

    # Tiled path: two H-tiles with halos (exercises boundary-row zeroing).
    out_tiled = jax.block_until_ready(
        double_convolution(x, w1, b1, w2, b2, tile_h=8))
    # Auto tile selection (single tile at this toy shape).
    out_auto = jax.block_until_ready(double_convolution(x, w1, b1, w2, b2))

    for out in (out_tiled, out_auto):
        assert out.shape == (B, C_out, H, W)
        # bf16 MXU operands -> loosened tolerance vs. the f32 reference.
        assert jnp.max(jnp.abs(out - ref)) < 3e-2

    print("KERNEL_OK")
</pallas_src>

<mosaic_0001>
module attributes {stable_mosaic.version = 11 : i64} {
  func.func @_double_conv_kernel(%arg0: i32, %arg1: i32, %arg2: memref<1x12x18x4xbf16, #tpu.memory_space<vmem>>, %arg3: memref<3x12x8xbf16, #tpu.memory_space<vmem>>, %arg4: memref<1x8xf32, #tpu.memory_space<vmem>>, %arg5: memref<3x8x24xbf16, #tpu.memory_space<vmem>>, %arg6: memref<8x1xf32, #tpu.memory_space<vmem>>, %arg7: memref<1x8x128xf32, #tpu.memory_space<vmem>>, %arg8: memref<10x18x8xbf16, #tpu.memory_space<vmem>>) attributes {dimension_semantics = [#tpu.dimension_semantics<parallel>, #tpu.dimension_semantics<parallel>], iteration_bounds = array<i64: 2, 2>, scalar_prefetch = 0 : i64, scratch_operands = 1 : i64, tpu.core_type = #tpu.core_type<tc>, window_params = [{transform_indices = @transform_0, window_bounds = array<i64: 1, 12, 18, 4>}, {pipeline_mode = #tpu.pipeline_mode<synchronous>, transform_indices = @transform_1, window_bounds = array<i64: 3, 12, 8>}, {pipeline_mode = #tpu.pipeline_mode<synchronous>, transform_indices = @transform_2, window_bounds = array<i64: 1, 8>}, {pipeline_mode = #tpu.pipeline_mode<synchronous>, transform_indices = @transform_3, window_bounds = array<i64: 3, 8, 24>}, {pipeline_mode = #tpu.pipeline_mode<synchronous>, transform_indices = @transform_4, window_bounds = array<i64: 8, 1>}, {transform_indices = @transform_5, window_bounds = array<i64: 1, 8, 128>}]} {
    %c0 = arith.constant 0 : index
    %c0_0 = arith.constant 0 : index
    %c0_1 = arith.constant 0 : index
    %c0_2 = arith.constant 0 : index
    %0 = vector.load %arg2[%c0, %c0_0, %c0_1, %c0_2] : memref<1x12x18x4xbf16, #tpu.memory_space<vmem>>, vector<1x12x18x4xbf16>
    %1 = vector.shape_cast %0 : vector<1x12x18x4xbf16> to vector<12x18x4xbf16>
    %2 = vector.extract_strided_slice %1 {offsets = [0, 0, 0], sizes = [10, 16, 4], strides = [1, 1, 1]} : vector<12x18x4xbf16> to vector<10x16x4xbf16>
    %3 = vector.extract_strided_slice %1 {offsets = [0, 1, 0], sizes = [10, 16, 4], strides = [1, 1, 1]} : vector<12x18x4xbf16> to vector<10x16x4xbf16>
    %4 = vector.extract_strided_slice %1 {offsets = [0, 2, 0], sizes = [10, 16, 4], strides = [1, 1, 1]} : vector<12x18x4xbf16> to vector<10x16x4xbf16>
    %5 = tpu.concatenate %2, %3, %4 in 2 : vector<10x16x4xbf16>, vector<10x16x4xbf16>, vector<10x16x4xbf16> -> vector<10x16x12xbf16>
    %6 = vector.shape_cast %5 : vector<10x16x12xbf16> to vector<160x12xbf16>
    %c0_3 = arith.constant 0 : index
    %c0_4 = arith.constant 0 : index
    %c0_5 = arith.constant 0 : index
    %7 = vector.load %arg3[%c0_3, %c0_4, %c0_5] : memref<3x12x8xbf16, #tpu.memory_space<vmem>>, vector<1x12x8xbf16>
    %8 = vector.shape_cast %7 : vector<1x12x8xbf16> to vector<12x8xbf16>
    %cst = arith.constant dense<0.000000e+00> : vector<160x8xf32>
    %9 = tpu.matmul %6, %8, %cst {dimension_numbers = #tpu.dot_dimension_numbers<[1], [0], [0], [1], [0, 0, 1, 1], [], []>} : vector<160x12xbf16>, vector<12x8xbf16>, vector<160x8xf32> -> vector<160x8xf32>
    %10 = vector.extract_strided_slice %1 {offsets = [1, 0, 0], sizes = [10, 16, 4], strides = [1, 1, 1]} : vector<12x18x4xbf16> to vector<10x16x4xbf16>
    %11 = vector.extract_strided_slice %1 {offsets = [1, 1, 0], sizes = [10, 16, 4], strides = [1, 1, 1]} : vector<12x18x4xbf16> to vector<10x16x4xbf16>
    %12 = vector.extract_strided_slice %1 {offsets = [1, 2, 0], sizes = [10, 16, 4], strides = [1, 1, 1]} : vector<12x18x4xbf16> to vector<10x16x4xbf16>
    %13 = tpu.concatenate %10, %11, %12 in 2 : vector<10x16x4xbf16>, vector<10x16x4xbf16>, vector<10x16x4xbf16> -> vector<10x16x12xbf16>
    %14 = vector.shape_cast %13 : vector<10x16x12xbf16> to vector<160x12xbf16>
    %c1 = arith.constant 1 : index
    %c0_6 = arith.constant 0 : index
    %c0_7 = arith.constant 0 : index
    %15 = vector.load %arg3[%c1, %c0_6, %c0_7] : memref<3x12x8xbf16, #tpu.memory_space<vmem>>, vector<1x12x8xbf16>
    %16 = vector.shape_cast %15 : vector<1x12x8xbf16> to vector<12x8xbf16>
    %cst_8 = arith.constant dense<0.000000e+00> : vector<160x8xf32>
    %17 = tpu.matmul %14, %16, %cst_8 {dimension_numbers = #tpu.dot_dimension_numbers<[1], [0], [0], [1], [0, 0, 1, 1], [], []>} : vector<160x12xbf16>, vector<12x8xbf16>, vector<160x8xf32> -> vector<160x8xf32>
    %18 = arith.addf %9, %17 : vector<160x8xf32>
    %19 = vector.extract_strided_slice %1 {offsets = [2, 0, 0], sizes = [10, 16, 4], strides = [1, 1, 1]} : vector<12x18x4xbf16> to vector<10x16x4xbf16>
    %20 = vector.extract_strided_slice %1 {offsets = [2, 1, 0], sizes = [10, 16, 4], strides = [1, 1, 1]} : vector<12x18x4xbf16> to vector<10x16x4xbf16>
    %21 = vector.extract_strided_slice %1 {offsets = [2, 2, 0], sizes = [10, 16, 4], strides = [1, 1, 1]} : vector<12x18x4xbf16> to vector<10x16x4xbf16>
    %22 = tpu.concatenate %19, %20, %21 in 2 : vector<10x16x4xbf16>, vector<10x16x4xbf16>, vector<10x16x4xbf16> -> vector<10x16x12xbf16>
    %23 = vector.shape_cast %22 : vector<10x16x12xbf16> to vector<160x12xbf16>
    %c2 = arith.constant 2 : index
    %c0_9 = arith.constant 0 : index
    %c0_10 = arith.constant 0 : index
    %24 = vector.load %arg3[%c2, %c0_9, %c0_10] : memref<3x12x8xbf16, #tpu.memory_space<vmem>>, vector<1x12x8xbf16>
    %25 = vector.shape_cast %24 : vector<1x12x8xbf16> to vector<12x8xbf16>
    %cst_11 = arith.constant dense<0.000000e+00> : vector<160x8xf32>
    %26 = tpu.matmul %23, %25, %cst_11 {dimension_numbers = #tpu.dot_dimension_numbers<[1], [0], [0], [1], [0, 0, 1, 1], [], []>} : vector<160x12xbf16>, vector<12x8xbf16>, vector<160x8xf32> -> vector<160x8xf32>
    %27 = arith.addf %18, %26 : vector<160x8xf32>
    %c0_12 = arith.constant 0 : index
    %c0_13 = arith.constant 0 : index
    %28 = vector.load %arg4[%c0_12, %c0_13] : memref<1x8xf32, #tpu.memory_space<vmem>>, vector<1x8xf32>
    %29 = vector.broadcast %28 : vector<1x8xf32> to vector<160x8xf32>
    %30 = arith.addf %27, %29 : vector<160x8xf32>
    %cst_14 = arith.constant 0.000000e+00 : f32
    %31 = vector.broadcast %cst_14 : f32 to vector<160x8xf32>
    %32 = arith.maximumf %30, %31 : vector<160x8xf32>
    %cst_15 = arith.constant 0.000000e+00 : bf16
    %33 = vector.broadcast %cst_15 : bf16 to vector<10x1x8xbf16>
    %c0_16 = arith.constant 0 : index
    %c0_17 = arith.constant 0 : index
    %c0_18 = arith.constant 0 : index
    %34 = vector.load %arg8[%c0_16, %c0_17, %c0_18] : memref<10x18x8xbf16, #tpu.memory_space<vmem>>, vector<10x1x8xbf16>
    tpu.vector_store %arg8[%c0_16, %c0_17, %c0_18], %33 {strides = array<i32>} : memref<10x18x8xbf16, #tpu.memory_space<vmem>>, vector<10x1x8xbf16>,
    %c0_19 = arith.constant 0 : index
    %c17 = arith.constant 17 : index
    %c0_20 = arith.constant 0 : index
    %35 = vector.load %arg8[%c0_19, %c17, %c0_20] : memref<10x18x8xbf16, #tpu.memory_space<vmem>>, vector<10x1x8xbf16>
    tpu.vector_store %arg8[%c0_19, %c17, %c0_20], %33 {strides = array<i32>} : memref<10x18x8xbf16, #tpu.memory_space<vmem>>, vector<10x1x8xbf16>,
    %36 = vector.shape_cast %32 : vector<160x8xf32> to vector<10x16x8xf32>
    %37 = arith.truncf %36 : vector<10x16x8xf32> to vector<10x16x8xbf16>
    %c0_21 = arith.constant 0 : index
    %c1_22 = arith.constant 1 : index
    %c0_23 = arith.constant 0 : index
    %38 = vector.load %arg8[%c0_21, %c1_22, %c0_23] : memref<10x18x8xbf16, #tpu.memory_space<vmem>>, vector<10x16x8xbf16>
    tpu.vector_store %arg8[%c0_21, %c1_22, %c0_23], %37 {strides = array<i32>} : memref<10x18x8xbf16, #tpu.memory_space<vmem>>, vector<10x16x8xbf16>,
    %cst_24 = arith.constant 0.000000e+00 : bf16
    %39 = vector.broadcast %cst_24 : bf16 to vector<1x18x8xbf16>
    %c0_i32 = arith.constant 0 : i32
    %40 = arith.cmpi eq, %arg1, %c0_i32 : i32
    %41 = arith.extui %40 : i1 to i32
    %c0_i32_25 = arith.constant 0 : i32
    %42 = arith.cmpi ne, %41, %c0_i32_25 : i32
    scf.if %42 {
      %c0_72 = arith.constant 0 : index
      %c0_73 = arith.constant 0 : index
      %c0_74 = arith.constant 0 : index
      %80 = vector.load %arg8[%c0_72, %c0_73, %c0_74] : memref<10x18x8xbf16, #tpu.memory_space<vmem>>, vector<1x18x8xbf16>
      tpu.vector_store %arg8[%c0_72, %c0_73, %c0_74], %39 {strides = array<i32>} : memref<10x18x8xbf16, #tpu.memory_space<vmem>>, vector<1x18x8xbf16>,
    } else {
    }
    %c1_i32 = arith.constant 1 : i32
    %43 = arith.cmpi eq, %arg1, %c1_i32 : i32
    %44 = arith.extui %43 : i1 to i32
    %c0_i32_26 = arith.constant 0 : i32
    %45 = arith.cmpi ne, %44, %c0_i32_26 : i32
    scf.if %45 {
      %c9 = arith.constant 9 : index
      %c0_72 = arith.constant 0 : index
      %c0_73 = arith.constant 0 : index
      %80 = vector.load %arg8[%c9, %c0_72, %c0_73] : memref<10x18x8xbf16, #tpu.memory_space<vmem>>, vector<1x18x8xbf16>
      tpu.vector_store %arg8[%c9, %c0_72, %c0_73], %39 {strides = array<i32>} : memref<10x18x8xbf16, #tpu.memory_space<vmem>>, vector<1x18x8xbf16>,
    } else {
    }
    %c0_27 = arith.constant 0 : index
    %c0_28 = arith.constant 0 : index
    %c0_29 = arith.constant 0 : index
    %46 = vector.load %arg8[%c0_27, %c0_28, %c0_29] : memref<10x18x8xbf16, #tpu.memory_space<vmem>>, vector<8x16x8xbf16>
    %c0_30 = arith.constant 0 : index
    %c1_31 = arith.constant 1 : index
    %c0_32 = arith.constant 0 : index
    %47 = vector.load %arg8[%c0_30, %c1_31, %c0_32] : memref<10x18x8xbf16, #tpu.memory_space<vmem>>, vector<8x16x8xbf16>
    %c0_33 = arith.constant 0 : index
    %c2_34 = arith.constant 2 : index
    %c0_35 = arith.constant 0 : index
    %48 = vector.load %arg8[%c0_33, %c2_34, %c0_35] : memref<10x18x8xbf16, #tpu.memory_space<vmem>>, vector<8x16x8xbf16>
    %49 = tpu.concatenate %46, %47, %48 in 2 : vector<8x16x8xbf16>, vector<8x16x8xbf16>, vector<8x16x8xbf16> -> vector<8x16x24xbf16>
    %50 = vector.shape_cast %49 : vector<8x16x24xbf16> to vector<128x24xbf16>
    %c0_36 = arith.constant 0 : index
    %c0_37 = arith.constant 0 : index
    %c0_38 = arith.constant 0 : index
    %51 = vector.load %arg5[%c0_36, %c0_37, %c0_38] : memref<3x8x24xbf16, #tpu.memory_space<vmem>>, vector<1x8x24xbf16>
    %52 = vector.shape_cast %51 : vector<1x8x24xbf16> to vector<8x24xbf16>
    %cst_39 = arith.constant dense<0.000000e+00> : vector<8x128xf32>
    %53 = tpu.matmul %52, %50, %cst_39 {dimension_numbers = #tpu.dot_dimension_numbers<[1], [1], [0], [0], [0, 0, 1, 0], [], []>} : vector<8x24xbf16>, vector<128x24xbf16>, vector<8x128xf32> -> vector<8x128xf32>
    %c1_40 = arith.constant 1 : index
    %c0_41 = arith.constant 0 : index
    %c0_42 = arith.constant 0 : index
    %54 = vector.load %arg8[%c1_40, %c0_41, %c0_42] : memref<10x18x8xbf16, #tpu.memory_space<vmem>>, vector<8x16x8xbf16>
    %c1_43 = arith.constant 1 : index
    %c1_44 = arith.constant 1 : index
    %c0_45 = arith.constant 0 : index
    %55 = vector.load %arg8[%c1_43, %c1_44, %c0_45] : memref<10x18x8xbf16, #tpu.memory_space<vmem>>, vector<8x16x8xbf16>
    %c1_46 = arith.constant 1 : index
    %c2_47 = arith.constant 2 : index
    %c0_48 = arith.constant 0 : index
    %56 = vector.load %arg8[%c1_46, %c2_47, %c0_48] : memref<10x18x8xbf16, #tpu.memory_space<vmem>>, vector<8x16x8xbf16>
    %57 = tpu.concatenate %54, %55, %56 in 2 : vector<8x16x8xbf16>, vector<8x16x8xbf16>, vector<8x16x8xbf16> -> vector<8x16x24xbf16>
    %58 = vector.shape_cast %57 : vector<8x16x24xbf16> to vector<128x24xbf16>
    %c1_49 = arith.constant 1 : index
    %c0_50 = arith.constant 0 : index
    %c0_51 = arith.constant 0 : index
    %59 = vector.load %arg5[%c1_49, %c0_50, %c0_51] : memref<3x8x24xbf16, #tpu.memory_space<vmem>>, vector<1x8x24xbf16>
    %60 = vector.shape_cast %59 : vector<1x8x24xbf16> to vector<8x24xbf16>
    %cst_52 = arith.constant dense<0.000000e+00> : vector<8x128xf32>
    %61 = tpu.matmul %60, %58, %cst_52 {dimension_numbers = #tpu.dot_dimension_numbers<[1], [1], [0], [0], [0, 0, 1, 0], [], []>} : vector<8x24xbf16>, vector<128x24xbf16>, vector<8x128xf32> -> vector<8x128xf32>
    %62 = arith.addf %53, %61 : vector<8x128xf32>
    %c2_53 = arith.constant 2 : index
    %c0_54 = arith.constant 0 : index
    %c0_55 = arith.constant 0 : index
    %63 = vector.load %arg8[%c2_53, %c0_54, %c0_55] : memref<10x18x8xbf16, #tpu.memory_space<vmem>>, vector<8x16x8xbf16>
    %c2_56 = arith.constant 2 : index
    %c1_57 = arith.constant 1 : index
    %c0_58 = arith.constant 0 : index
    %64 = vector.load %arg8[%c2_56, %c1_57, %c0_58] : memref<10x18x8xbf16, #tpu.memory_space<vmem>>, vector<8x16x8xbf16>
    %c2_59 = arith.constant 2 : index
    %c2_60 = arith.constant 2 : index
    %c0_61 = arith.constant 0 : index
    %65 = vector.load %arg8[%c2_59, %c2_60, %c0_61] : memref<10x18x8xbf16, #tpu.memory_space<vmem>>, vector<8x16x8xbf16>
    %66 = tpu.concatenate %63, %64, %65 in 2 : vector<8x16x8xbf16>, vector<8x16x8xbf16>, vector<8x16x8xbf16> -> vector<8x16x24xbf16>
    %67 = vector.shape_cast %66 : vector<8x16x24xbf16> to vector<128x24xbf16>
    %c2_62 = arith.constant 2 : index
    %c0_63 = arith.constant 0 : index
    %c0_64 = arith.constant 0 : index
    %68 = vector.load %arg5[%c2_62, %c0_63, %c0_64] : memref<3x8x24xbf16, #tpu.memory_space<vmem>>, vector<1x8x24xbf16>
    %69 = vector.shape_cast %68 : vector<1x8x24xbf16> to vector<8x24xbf16>
    %cst_65 = arith.constant dense<0.000000e+00> : vector<8x128xf32>
    %70 = tpu.matmul %69, %67, %cst_65 {dimension_numbers = #tpu.dot_dimension_numbers<[1], [1], [0], [0], [0, 0, 1, 0], [], []>} : vector<8x24xbf16>, vector<128x24xbf16>, vector<8x128xf32> -> vector<8x128xf32>
    %71 = arith.addf %62, %70 : vector<8x128xf32>
    %c0_66 = arith.constant 0 : index
    %c0_67 = arith.constant 0 : index
    %72 = vector.load %arg6[%c0_66, %c0_67] : memref<8x1xf32, #tpu.memory_space<vmem>>, vector<8x1xf32>
    %73 = vector.broadcast %72 : vector<8x1xf32> to vector<8x128xf32>
    %74 = arith.addf %71, %73 : vector<8x128xf32>
    %cst_68 = arith.constant 0.000000e+00 : f32
    %75 = vector.broadcast %cst_68 : f32 to vector<8x128xf32>
    %76 = arith.maximumf %74, %75 : vector<8x128xf32>
    %c0_69 = arith.constant 0 : index
    %c0_70 = arith.constant 0 : index
    %c0_71 = arith.constant 0 : index
    %77 = vector.load %arg7[%c0_69, %c0_70, %c0_71] : memref<1x8x128xf32, #tpu.memory_space<vmem>>, vector<1x8x128xf32>
    %78 = vector.shape_cast %77 : vector<1x8x128xf32> to vector<8x128xf32>
    %79 = vector.shape_cast %76 : vector<8x128xf32> to vector<1x8x128xf32>
    tpu.vector_store %arg7[%c0_69, %c0_70, %c0_71], %79 {strides = array<i32>} : memref<1x8x128xf32, #tpu.memory_space<vmem>>, vector<1x8x128xf32>,
    return
  }
  func.func @transform_0(%arg0: i32, %arg1: i32) -> (i32, i32, i32, i32) {
    %c2_i32 = arith.constant 2 : i32
    %0 = arith.muli %arg0, %c2_i32 : i32
    %1 = arith.addi %0, %arg1 : i32
    %c0_i32 = arith.constant 0 : i32
    %c0_i32_0 = arith.constant 0 : i32
    %c0_i32_1 = arith.constant 0 : i32
    %c0_i32_2 = arith.constant 0 : i32
    return %1, %c0_i32, %c0_i32_0, %c0_i32_1 : i32, i32, i32, i32
  }
  func.func @transform_1(%arg0: i32, %arg1: i32) -> (i32, i32, i32) {
    %c0_i32 = arith.constant 0 : i32
    %c0_i32_0 = arith.constant 0 : i32
    %c0_i32_1 = arith.constant 0 : i32
    %c0_i32_2 = arith.constant 0 : i32
    return %c0_i32, %c0_i32_0, %c0_i32_1 : i32, i32, i32
  }
  func.func @transform_2(%arg0: i32, %arg1: i32) -> (i32, i32) {
    %c0_i32 = arith.constant 0 : i32
    %c0_i32_0 = arith.constant 0 : i32
    %c0_i32_1 = arith.constant 0 : i32
    return %c0_i32, %c0_i32_0 : i32, i32
  }
  func.func @transform_3(%arg0: i32, %arg1: i32) -> (i32, i32, i32) {
    %c0_i32 = arith.constant 0 : i32
    %c0_i32_0 = arith.constant 0 : i32
    %c0_i32_1 = arith.constant 0 : i32
    %c0_i32_2 = arith.constant 0 : i32
    return %c0_i32, %c0_i32_0, %c0_i32_1 : i32, i32, i32
  }
  func.func @transform_4(%arg0: i32, %arg1: i32) -> (i32, i32) {
    %c0_i32 = arith.constant 0 : i32
    %c0_i32_0 = arith.constant 0 : i32
    %c0_i32_1 = arith.constant 0 : i32
    return %c0_i32, %c0_i32_0 : i32, i32
  }
  func.func @transform_5(%arg0: i32, %arg1: i32) -> (i32, i32, i32) {
    %c0_i32 = arith.constant 0 : i32
    %c0_i32_0 = arith.constant 0 : i32
    return %arg0, %c0_i32, %arg1 : i32, i32, i32
  }
}

</mosaic_0001>

<llo_original>
// kernel: tpu_custom_call.1
$region0: #{tpu_custom_call.1}
  #allocation0 [shape = 'u32[]', space=smem, size = 0x4, offset = 0x4, fixed_abs, tag = 'smem constant byte address 0x4 - core index']
  #allocation1 [shape = 'u32[72,128]{1,0:T(1,128)}', space=vmem, size = 0x9000, scoped, tag = 'internal scratch']
  #allocation2 [shape = 'bf16[10,18,8]{2,1,0:T(8,128)(2,1)}', space=vmem, size = 0xf000, scoped, tag = 'scratch operand']
  %s0 = inlined_call_operand.vmem [shape: bf16[4,12,18,4], index: 0, kind: input, shape index: {}]
  %s1 = inlined_call_operand.vmem [shape: bf16[3,12,8], index: 1, kind: input, shape index: {}]
  %s2 = inlined_call_operand.vmem [shape: f32[1,8], index: 2, kind: input, shape index: {}]
  %s3 = inlined_call_operand.vmem [shape: bf16[3,8,24], index: 3, kind: input, shape index: {}]
  %s4 = inlined_call_operand.vmem [shape: f32[8,1], index: 4, kind: input, shape index: {}]
  %s5 = inlined_call_operand.hbm [shape: f32[2,8,256], index: 5, kind: output, shape index: {}]
  %s6 = sld [smem:[#allocation0]]
  $region61: #{tpu_custom_call.1} parent=0
    _
  %s8 = ssub.s32 1, %s6
  %s9 = scalar_select 0, %s8, %s6
  $region1: #{tpu_custom_call.1} parent=0
    #allocation3 [shape = 'u8[8192]{0}', space=vmem, size = 0x2000, scoped, tag = 'output window, operand 0']
    #allocation4 [shape = 's32[2]{0}', space=sflag, size = 0x8, scoped, tag = 'scoped memory for tpu_custom_call.1']
    %10 = vsyncpa [#allocation4], 0
    %s11 = scalar_lea.sflag [#allocation4], 1
    %12 = vsyncpa %s11, 0
    loop: start=0, step=1, limit=6
    $region2: #{tpu_custom_call.1} parent=1 // loop_pre_header
      _
    $region3: #{tpu_custom_call.1} parent=1 // loop_header
      %s14 = sphi 0, %s18
      %p15 = scmp.ge.s32.totalorder %s14, 6
      %s21 = sphi 0, %s33
      %s22 = sphi 0, %s29
      %s23 = sphi 0, %s21
      %s24 = sphi 0, %s22
      %s25 = sphi 0, %s23
      %s26 = sphi 0, %s24
      %s40 = sphi 0, %s42
      %s43 = sphi 0, %s40
      %s44 = sphi 0, %s43
      %s60 = sphi 0, %s44
      %s64 = sphi 0, %s64
      %s66 = sphi 0, %s64
      %s67 = sphi 0, %s66
      %s81 = sphi 0, %s67
      %s85 = sphi 0, %s85
      %s87 = sphi 0, %s85
      %s88 = sphi 0, %s87
      %s102 = sphi 0, %s88
      %s106 = sphi 0, %s106
      %s108 = sphi 0, %s106
      %s109 = sphi 0, %s108
      %s123 = sphi 0, %s109
      %s127 = sphi 0, %s127
      %s129 = sphi 0, %s127
      %s130 = sphi 0, %s129
      %s144 = sphi 0, %s130
      %s152 = sphi 0, %s154
      %s155 = sphi 0, %s152
      %s156 = sphi 0, %s155
      %s172 = sphi 0, %s156
    $region4: #{tpu_custom_call.1} parent=1 // loop_header_branch
      %17 = sbr.rel (%p15) target = $region8
    $region5: #{tpu_custom_call.1} parent=1 // loop_body
      %s19 = ssub.s32 %s14, 1
      %s20 = ssub.s32 %s14, 2
      %s27 = sadd.s32 1, %s22
      %p28 = scmp.ge.s32.totalorder %s27, 2
      %s29 = scalar_select %p28, 0, %s27
      %s30 = sadd.s32 1, %s21
      %s31 = scalar_select %p28, %s30, %s21
      %p32 = scmp.ge.s32.totalorder %s31, 2
      %s33 = scalar_select %p32, 0, %s31
      %s34 = smul.u32 %s21, 2
      %s35 = sadd.s32 %s34, %s22
      %s36 = smul.u32 %s33, 2
      %s37 = sadd.s32 %s36, %s29
      %s38 = ssub.s32 %s35, %s37
      %p39 = scmp.eq.s32.totalorder %s38, 0
      %s41 = sadd.s32 %s40, 1
      %s42 = scalar_select %p39, %s40, %s41
      %p45 = pneg %p39
      %p46 = scmp.eq.s32.totalorder %s14, 3
      %p47 = por %p45, %p46
      %p48 = scmp.ne.s32.totalorder %s40, %s43
      %p49 = scmp.eq.s32.totalorder %s14, 0
      %p50 = por %p48, %p49
      %p51 = scmp.ne.s32.totalorder %s40, %s43
      %p52 = scmp.eq.s32.totalorder %s19, 3
      %p53 = por %p51, %p52
      %p54 = scmp.ne.s32.totalorder %s43, %s44
      %p55 = scmp.eq.s32.totalorder %s19, 0
      %p56 = por %p54, %p55
      %p57 = scmp.ne.s32.totalorder %s43, %s44
      %p58 = scmp.eq.s32.totalorder %s20, 3
      %p59 = por %p57, %p58
      %p61 = scmp.ne.s32.totalorder %s44, %s60
      %p62 = scmp.eq.s32.totalorder %s20, 0
      %p63 = por %p61, %p62
      %s65 = sadd.s32 %s64, 1
      %p68 = scmp.eq.s32.totalorder %s14, 3
      %p69 = scmp.ne.s32.totalorder %s64, %s66
      %p70 = scmp.eq.s32.totalorder %s14, 0
      %p71 = por %p69, %p70
      %p72 = scmp.ne.s32.totalorder %s64, %s66
      %p73 = scmp.eq.s32.totalorder %s19, 3
      %p74 = por %p72, %p73
      %p75 = scmp.ne.s32.totalorder %s66, %s67
      %p76 = scmp.eq.s32.totalorder %s19, 0
      %p77 = por %p75, %p76
      %p78 = scmp.ne.s32.totalorder %s66, %s67
      %p79 = scmp.eq.s32.totalorder %s20, 3
      %p80 = por %p78, %p79
      %p82 = scmp.ne.s32.totalorder %s67, %s81
      %p83 = scmp.eq.s32.totalorder %s20, 0
      %p84 = por %p82, %p83
      %s86 = sadd.s32 %s85, 1
      %p89 = scmp.eq.s32.totalorder %s14, 3
      %p90 = scmp.ne.s32.totalorder %s85, %s87
      %p91 = scmp.eq.s32.totalorder %s14, 0
      %p92 = por %p90, %p91
      %p93 = scmp.ne.s32.totalorder %s85, %s87
      %p94 = scmp.eq.s32.totalorder %s19, 3
      %p95 = por %p93, %p94
      %p96 = scmp.ne.s32.totalorder %s87, %s88
      %p97 = scmp.eq.s32.totalorder %s19, 0
      %p98 = por %p96, %p97
      %p99 = scmp.ne.s32.totalorder %s87, %s88
      %p100 = scmp.eq.s32.totalorder %s20, 3
      %p101 = por %p99, %p100
      %p103 = scmp.ne.s32.totalorder %s88, %s102
      %p104 = scmp.eq.s32.totalorder %s20, 0
      %p105 = por %p103, %p104
      %s107 = sadd.s32 %s106, 1
      %p110 = scmp.eq.s32.totalorder %s14, 3
      %p111 = scmp.ne.s32.totalorder %s106, %s108
      %p112 = scmp.eq.s32.totalorder %s14, 0
      %p113 = por %p111, %p112
      %p114 = scmp.ne.s32.totalorder %s106, %s108
      %p115 = scmp.eq.s32.totalorder %s19, 3
      %p116 = por %p114, %p115
      %p117 = scmp.ne.s32.totalorder %s108, %s109
      %p118 = scmp.eq.s32.totalorder %s19, 0
      %p119 = por %p117, %p118
      %p120 = scmp.ne.s32.totalorder %s108, %s109
      %p121 = scmp.eq.s32.totalorder %s20, 3
      %p122 = por %p120, %p121
      %p124 = scmp.ne.s32.totalorder %s109, %s123
      %p125 = scmp.eq.s32.totalorder %s20, 0
      %p126 = por %p124, %p125
      %s128 = sadd.s32 %s127, 1
      %p131 = scmp.eq.s32.totalorder %s14, 3
      %p132 = scmp.ne.s32.totalorder %s127, %s129
      %p133 = scmp.eq.s32.totalorder %s14, 0
      %p134 = por %p132, %p133
      %p135 = scmp.ne.s32.totalorder %s127, %s129
      %p136 = scmp.eq.s32.totalorder %s19, 3
      %p137 = por %p135, %p136
      %p138 = scmp.ne.s32.totalorder %s129, %s130
      %p139 = scmp.eq.s32.totalorder %s19, 0
      %p140 = por %p138, %p139
      %p141 = scmp.ne.s32.totalorder %s129, %s130
      %p142 = scmp.eq.s32.totalorder %s20, 3
      %p143 = por %p141, %p142
      %p145 = scmp.ne.s32.totalorder %s130, %s144
      %p146 = scmp.eq.s32.totalorder %s20, 0
      %p147 = por %p145, %p146
      %s148 = ssub.s32 %s21, %s33
      %s149 = ssub.s32 %s22, %s29
      %s150 = sor.u32 %s148, %s149
      %p151 = scmp.eq.s32.totalorder %s150, 0
      %s153 = sadd.s32 %s152, 1
      %s154 = scalar_select %p151, %s152, %s153
      %p157 = pneg %p151
      %p158 = scmp.eq.s32.totalorder %s14, 3
      %p159 = por %p157, %p158
      %p160 = scmp.ne.s32.totalorder %s152, %s155
      %p161 = scmp.eq.s32.totalorder %s14, 0
      %p162 = por %p160, %p161
      %p163 = scmp.ne.s32.totalorder %s152, %s155
      %p164 = scmp.eq.s32.totalorder %s19, 3
      %p165 = por %p163, %p164
      %p166 = scmp.ne.s32.totalorder %s155, %s156
      %p167 = scmp.eq.s32.totalorder %s19, 0
      %p168 = por %p166, %p167
      %p169 = scmp.ne.s32.totalorder %s155, %s156
      %p170 = scmp.eq.s32.totalorder %s20, 3
      %p171 = por %p169, %p170
      %p173 = scmp.ne.s32.totalorder %s156, %s172
      %p174 = scmp.eq.s32.totalorder %s20, 0
      %p175 = por %p173, %p174
      %p176 = scmp.le.s32.totalorder 1, %s14
      %p177 = scmp.lt.s32.totalorder %s14, 5
      %p178 = pnand %p176, %p177
      %p179 = pneg %p178
      // Predicated region
      $region9: #{tpu_custom_call.1} parent=5 // pred_check
        _
      $region10: #{tpu_custom_call.1} parent=5 // pred_check_branch
        %181 = sbr.rel (%p178) target = $region12
      $region11: #{tpu_custom_call.1} parent=5 // pred_region
        %s182 = ssub.s32 %s14, 1
        // Predicated region
        $region13: #{tpu_custom_call.1} parent=11 // pred_check
          %p183 = pneg %p77
        $region14: #{tpu_custom_call.1} parent=11 // pred_check_branch
          %185 = sbr.rel (%p183) target = $region16
        $region15: #{tpu_custom_call.1} parent=11 // pred_region
          _
        $region16: #{tpu_custom_call.1} parent=11 // pred_fallthru
          _
        // Predicated region
        $region17: #{tpu_custom_call.1} parent=11 // pred_check
          %p186 = pneg %p98
        $region18: #{tpu_custom_call.1} parent=11 // pred_check_branch
          %188 = sbr.rel (%p186) target = $region20
        $region19: #{tpu_custom_call.1} parent=11 // pred_region
          _
        $region20: #{tpu_custom_call.1} parent=11 // pred_fallthru
          _
        // Predicated region
        $region21: #{tpu_custom_call.1} parent=11 // pred_check
          %p189 = pneg %p119
        $region22: #{tpu_custom_call.1} parent=11 // pred_check_branch
          %191 = sbr.rel (%p189) target = $region24
        $region23: #{tpu_custom_call.1} parent=11 // pred_region
          _
        $region24: #{tpu_custom_call.1} parent=11 // pred_fallthru
          _
        // Predicated region
        $region25: #{tpu_custom_call.1} parent=11 // pred_check
          %p192 = pneg %p140
        $region26: #{tpu_custom_call.1} parent=11 // pred_check_branch
          %194 = sbr.rel (%p192) target = $region28
        $region27: #{tpu_custom_call.1} parent=11 // pred_region
          _
        $region28: #{tpu_custom_call.1} parent=11 // pred_fallthru
          _
      $region12: #{tpu_custom_call.1} parent=5 // pred_fallthru
        _
      %p195 = scmp.lt.s32.totalorder %s14, 4
      // Predicated region
      $region29: #{tpu_custom_call.1} parent=5 // pred_check
        %p196 = pneg %p195
      $region30: #{tpu_custom_call.1} parent=5 // pred_check_branch
        %198 = sbr.rel (%p196) target = $region32
      $region31: #{tpu_custom_call.1} parent=5 // pred_region
        // Predicated region
        $region33: #{tpu_custom_call.1} parent=31 // pred_check
          %p199 = pneg %p50
        $region34: #{tpu_custom_call.1} parent=31 // pred_check_branch
          %201 = sbr.rel (%p199) target = $region36
        $region35: #{tpu_custom_call.1} parent=31 // pred_region
          %s202 = smul.u32 %s21, 2
          %s203 = sadd.s32 %s202, %s22
          %p204 = scmp.lt.s32.totalorder %s203, 3
          %s205 = scalar_select %p204, %s203, 3
          %s206 = smul.addr %s205, 36
          %s207 = smul.addr %s206, 4
          %s208 = scalar_lea.vmem %s0, %s207
          %s209 = smul.u32 %s21, 2
          %s210 = sadd.s32 %s209, %s22
        $region36: #{tpu_custom_call.1} parent=31 // pred_fallthru
          _
      $region32: #{tpu_custom_call.1} parent=5 // pred_fallthru
        _
      %p211 = scmp.le.s32.totalorder 1, %s14
      %p212 = scmp.lt.s32.totalorder %s14, 5
      %p213 = pnand %p211, %p212
      %p214 = pneg %p213
      // Predicated region
      $region37: #{tpu_custom_call.1} parent=5 // pred_check
        _
      $region38: #{tpu_custom_call.1} parent=5 // pred_check_branch
        %216 = sbr.rel (%p213) target = $region40
      $region39: #{tpu_custom_call.1} parent=5 // pred_region
        %s217 = ssub.s32 %s14, 1
        %s218 = smul.u32 %s23, 2
        %s219 = sadd.s32 %s218, %s24
        %p220 = scmp.lt.s32.totalorder %s219, 3
        %s221 = scalar_select %p220, %s219, 3
        %s222 = smul.addr %s221, 36
        %s223 = smul.addr %s222, 4
        %s224 = scalar_lea.vmem %s0, %s223
        %p225 = pneg %p56
        %p226 = pneg %p53
        %p227 = pneg %p77
        %p228 = pneg %p74
        %p229 = pneg %p98
        %p230 = pneg %p95
        %p231 = pneg %p119
        %p232 = pneg %p116
        %p233 = pneg %p140
        %p234 = pneg %p137
        %p235 = pneg %p168
        %p236 = pneg %p165
        %s237 = sand.u32 %s155, 1
        %s238 = scalar_lea.sflag [#allocation4], %s237
        %s239 = sand.u32 %s155, 1
        %s240 = smul.addr %s239, 8
        %s241 = scalar_lea.vmem [#allocation3], %s240
        %s242 = smul.u32 %s23, 2
        %s243 = sadd.s32 %s242, %s24
        %p244 = scmp.lt.s32.totalorder %s243, 3
        %s245 = scalar_select %p244, %s243, 3
        %s246 = smul.addr %s245, 36
        %s247 = smul.addr %s246, 4
        %s248 = scalar_lea.vmem %s0, %s247
        %s249 = smul.u32 %s23, 2
        %s250 = sadd.s32 %s249, %s24
        %v252 = vld [vmem:[%s248] sm:$0xf]
        %v253 = vld [vmem:[%s248 + $0x4] sm:$0xf]
        %v254 = vld [vmem:[%s248 + $0x8] sm:$0x1]
        %v255 = vld [vmem:[%s248 + $0xc] sm:$0xf]
        %v256 = vld [vmem:[%s248 + $0x10] sm:$0xf]
        %v257 = vld [vmem:[%s248 + $0x14] sm:$0x1]
        %v258 = vld [vmem:[%s248 + $0x18] sm:$0xf]
        %v259 = vld [vmem:[%s248 + $0x1c] sm:$0xf]
        %v260 = vld [vmem:[%s248 + $0x20] sm:$0x1]
        %v261 = vld [vmem:[%s248 + $0x24] sm:$0xf]
        %v262 = vld [vmem:[%s248 + $0x28] sm:$0xf]
        %v263 = vld [vmem:[%s248 + $0x2c] sm:$0x1]
        %v264 = vld [vmem:[%s248 + $0x30] sm:$0xf]
        %v265 = vld [vmem:[%s248 + $0x34] sm:$0xf]
        %v266 = vld [vmem:[%s248 + $0x38] sm:$0x1]
        %v267 = vld [vmem:[%s248 + $0x3c] sm:$0xf]
        %v268 = vld [vmem:[%s248 + $0x40] sm:$0xf]
        %v269 = vld [vmem:[%s248 + $0x44] sm:$0x1]
        %v270 = vld [vmem:[%s248 + $0x48] sm:$0xf]
        %v271 = vld [vmem:[%s248 + $0x4c] sm:$0xf]
        %v272 = vld [vmem:[%s248 + $0x50] sm:$0x1]
        %v273 = vld [vmem:[%s248 + $0x54] sm:$0xf]
        %v274 = vld [vmem:[%s248 + $0x58] sm:$0xf]
        %v275 = vld [vmem:[%s248 + $0x5c] sm:$0x1]
        %v276 = vld [vmem:[%s248 + $0x60] sm:$0xf]
        %v277 = vld [vmem:[%s248 + $0x64] sm:$0xf]
        %v278 = vld [vmem:[%s248 + $0x68] sm:$0x1]
        %v279 = vld [vmem:[%s248 + $0x6c] sm:$0xf]
        %v280 = vld [vmem:[%s248 + $0x70] sm:$0xf]
        %v281 = vld [vmem:[%s248 + $0x74] sm:$0x1]
        %v282 = vld [vmem:[%s248 + $0x78] sm:$0xf]
        %v283 = vld [vmem:[%s248 + $0x7c] sm:$0xf]
        %v284 = vld [vmem:[%s248 + $0x80] sm:$0x1]
        %v285 = vld [vmem:[%s248 + $0x84] sm:$0xf]
        %v286 = vld [vmem:[%s248 + $0x88] sm:$0xf]
        %v287 = vld [vmem:[%s248 + $0x8c] sm:$0x1]
        %v308 = vunpack.c.l.b16 %v252
        %v309 = vunpack.c.l.b16 %v253
        %v310 = vunpack.c.l.b16 %v255
        %v311 = vunpack.c.l.b16 %v256
        %v312 = vunpack.c.l.b16 %v258
        %v313 = vunpack.c.l.b16 %v259
        %v314 = vunpack.c.l.b16 %v261
        %v315 = vunpack.c.l.b16 %v262
        %v316 = vunpack.c.l.b16 %v264
        %v317 = vunpack.c.l.b16 %v265
        %v318 = vunpack.c.l.b16 %v267
        %v319 = vunpack.c.l.b16 %v268
        %v320 = vunpack.c.l.b16 %v270
        %v321 = vunpack.c.l.b16 %v271
        %v322 = vunpack.c.l.b16 %v273
        %v323 = vunpack.c.l.b16 %v274
        %v324 = vunpack.c.l.b16 %v276
        %v325 = vunpack.c.l.b16 %v277
        %v326 = vunpack.c.l.b16 %v279
        %v327 = vunpack.c.l.b16 %v280
        %v328 = vpack.c.b16 %v309, %v308
        %v329 = vpack.c.b16 %v311, %v310
        %v330 = vpack.c.b16 %v313, %v312
        %v331 = vpack.c.b16 %v315, %v314
        %v332 = vpack.c.b16 %v317, %v316
        %v333 = vpack.c.b16 %v319, %v318
        %v334 = vpack.c.b16 %v321, %v320
        %v335 = vpack.c.b16 %v323, %v322
        %v336 = vpack.c.b16 %v325, %v324
        %v337 = vpack.c.b16 %v327, %v326
        %v348 = vunpack.c.l.b16 %v254
        %v349 = vunpack.c.l.b16 %v257
        %v350 = vunpack.c.l.b16 %v260
        %v351 = vunpack.c.l.b16 %v263
        %v352 = vunpack.c.l.b16 %v266
        %v353 = vunpack.c.l.b16 %v269
        %v354 = vunpack.c.l.b16 %v272
        %v355 = vunpack.c.l.b16 %v275
        %v356 = vunpack.c.l.b16 %v278
        %v357 = vunpack.c.l.b16 %v281
        %v358 = vpack.c.b16 %v348, %v348
        %v359 = vpack.c.b16 %v349, %v349
        %v360 = vpack.c.b16 %v350, %v350
        %v361 = vpack.c.b16 %v351, %v351
        %v362 = vpack.c.b16 %v352, %v352
        %v363 = vpack.c.b16 %v353, %v353
        %v364 = vpack.c.b16 %v354, %v354
        %v365 = vpack.c.b16 %v355, %v355
        %v366 = vpack.c.b16 %v356, %v356
        %v367 = vpack.c.b16 %v357, %v357
        %vm368 = vsmask.f32 7424
        %v370 = vshrl.u32 %v328, 16
        %v372 = vshll.u32 %v328, 16
        %v374 = vrot.slane %v372, 1
        %v375 = vor.u32 %v370, %v374
        %v377 = vshll.u32 %v358, 16
        %v379 = vrot.slane %v377, 1
        %v380 = vsel %vm368, %v375, %v379
        %v382 = vshrl.u32 %v329, 16
        %v384 = vshll.u32 %v329, 16
        %v386 = vrot.slane %v384, 1
        %v387 = vor.u32 %v382, %v386
        %v389 = vshll.u32 %v359, 16
        %v391 = vrot.slane %v389, 1
        %v392 = vsel %vm368, %v387, %v391
        %v394 = vshrl.u32 %v330, 16
        %v396 = vshll.u32 %v330, 16
        %v398 = vrot.slane %v396, 1
        %v399 = vor.u32 %v394, %v398
        %v401 = vshll.u32 %v360, 16
        %v403 = vrot.slane %v401, 1
        %v404 = vsel %vm368, %v399, %v403
        %v406 = vshrl.u32 %v331, 16
        %v408 = vshll.u32 %v331, 16
        %v410 = vrot.slane %v408, 1
        %v411 = vor.u32 %v406, %v410
        %v413 = vshll.u32 %v361, 16
        %v415 = vrot.slane %v413, 1
        %v416 = vsel %vm368, %v411, %v415
        %v418 = vshrl.u32 %v332, 16
        %v420 = vshll.u32 %v332, 16
        %v422 = vrot.slane %v420, 1
        %v423 = vor.u32 %v418, %v422
        %v425 = vshll.u32 %v362, 16
        %v427 = vrot.slane %v425, 1
        %v428 = vsel %vm368, %v423, %v427
        %v430 = vshrl.u32 %v333, 16
        %v432 = vshll.u32 %v333, 16
        %v434 = vrot.slane %v432, 1
        %v435 = vor.u32 %v430, %v434
        %v437 = vshll.u32 %v363, 16
        %v439 = vrot.slane %v437, 1
        %v440 = vsel %vm368, %v435, %v439
        %v442 = vshrl.u32 %v334, 16
        %v444 = vshll.u32 %v334, 16
        %v446 = vrot.slane %v444, 1
        %v447 = vor.u32 %v442, %v446
        %v449 = vshll.u32 %v364, 16
        %v451 = vrot.slane %v449, 1
        %v452 = vsel %vm368, %v447, %v451
        %v454 = vshrl.u32 %v335, 16
        %v456 = vshll.u32 %v335, 16
        %v458 = vrot.slane %v456, 1
        %v459 = vor.u32 %v454, %v458
        %v461 = vshll.u32 %v365, 16
        %v463 = vrot.slane %v461, 1
        %v464 = vsel %vm368, %v459, %v463
        %v466 = vshrl.u32 %v336, 16
        %v468 = vshll.u32 %v336, 16
        %v470 = vrot.slane %v468, 1
        %v471 = vor.u32 %v466, %v470
        %v473 = vshll.u32 %v366, 16
        %v475 = vrot.slane %v473, 1
        %v476 = vsel %vm368, %v471, %v475
        %v478 = vshrl.u32 %v337, 16
        %v480 = vshll.u32 %v337, 16
        %v482 = vrot.slane %v480, 1
        %v483 = vor.u32 %v478, %v482
        %v485 = vshll.u32 %v367, 16
        %v487 = vrot.slane %v485, 1
        %v488 = vsel %vm368, %v483, %v487
        %489 = vrot.lane.b32.xlu0 %v380, 4
        %v490 = vpop.permute.xlu0 %489
        %491 = vrot.lane.b32.xlu0 %v392, 4
        %v492 = vpop.permute.xlu0 %491
        %493 = vrot.lane.b32.xlu0 %v404, 4
        %v494 = vpop.permute.xlu0 %493
        %495 = vrot.lane.b32.xlu0 %v416, 4
        %v496 = vpop.permute.xlu0 %495
        %497 = vrot.lane.b32.xlu0 %v428, 4
        %v498 = vpop.permute.xlu0 %497
        %499 = vrot.lane.b32.xlu0 %v440, 4
        %v500 = vpop.permute.xlu0 %499
        %501 = vrot.lane.b32.xlu0 %v452, 4
        %v502 = vpop.permute.xlu0 %501
        %503 = vrot.lane.b32.xlu0 %v464, 4
        %v504 = vpop.permute.xlu0 %503
        %505 = vrot.lane.b32.xlu0 %v476, 4
        %v506 = vpop.permute.xlu0 %505
        %507 = vrot.lane.b32.xlu0 %v488, 4
        %v508 = vpop.permute.xlu0 %507
        %vm509 = vcmask 1046528
        %v510 = vrot.slane %v328, 1
        %v511 = vrot.slane %v358, 1
        %v512 = vsel %vm509, %v510, %v511
        %v513 = vrot.slane %v329, 1
        %v514 = vrot.slane %v359, 1
        %v515 = vsel %vm509, %v513, %v514
        %v516 = vrot.slane %v330, 1
        %v517 = vrot.slane %v360, 1
        %v518 = vsel %vm509, %v516, %v517
        %v519 = vrot.slane %v331, 1
        %v520 = vrot.slane %v361, 1
        %v521 = vsel %vm509, %v519, %v520
        %v522 = vrot.slane %v332, 1
        %v523 = vrot.slane %v362, 1
        %v524 = vsel %vm509, %v522, %v523
        %v525 = vrot.slane %v333, 1
        %v526 = vrot.slane %v363, 1
        %v527 = vsel %vm509, %v525, %v526
        %v528 = vrot.slane %v334, 1
        %v529 = vrot.slane %v364, 1
        %v530 = vsel %vm509, %v528, %v529
        %v531 = vrot.slane %v335, 1
        %v532 = vrot.slane %v365, 1
        %v533 = vsel %vm509, %v531, %v532
        %v534 = vrot.slane %v336, 1
        %v535 = vrot.slane %v366, 1
        %v536 = vsel %vm509, %v534, %v535
        %v537 = vrot.slane %v337, 1
        %v538 = vrot.slane %v367, 1
        %v539 = vsel %vm509, %v537, %v538
        %540 = vrot.lane.b32.xlu0 %v512, 8
        %v541 = vpop.permute.xlu0 %540
        %542 = vrot.lane.b32.xlu0 %v515, 8
        %v543 = vpop.permute.xlu0 %542
        %544 = vrot.lane.b32.xlu0 %v518, 8
        %v545 = vpop.permute.xlu0 %544
        %546 = vrot.lane.b32.xlu0 %v521, 8
        %v547 = vpop.permute.xlu0 %546
        %548 = vrot.lane.b32.xlu0 %v524, 8
        %v549 = vpop.permute.xlu0 %548
        %550 = vrot.lane.b32.xlu0 %v527, 8
        %v551 = vpop.permute.xlu0 %550
        %552 = vrot.lane.b32.xlu0 %v530, 8
        %v553 = vpop.permute.xlu0 %552
        %554 = vrot.lane.b32.xlu0 %v533, 8
        %v555 = vpop.permute.xlu0 %554
        %556 = vrot.lane.b32.xlu0 %v536, 8
        %v557 = vpop.permute.xlu0 %556
        %558 = vrot.lane.b32.xlu0 %v539, 8
        %v559 = vpop.permute.xlu0 %558
        %vm560 = vcmask 31744
        %v562 = vsel %vm560, %v328, %v490
        %v564 = vsel %vm560, %v329, %v492
        %v566 = vsel %vm560, %v330, %v494
        %v568 = vsel %vm560, %v331, %v496
        %v570 = vsel %vm560, %v332, %v498
        %v572 = vsel %vm560, %v333, %v500
        %v574 = vsel %vm560, %v334, %v502
        %v576 = vsel %vm560, %v335, %v504
        %v578 = vsel %vm560, %v336, %v506
        %v580 = vsel %vm560, %v337, %v508
        %vm581 = vcmask 64512
        %v583 = vsel %vm581, %v562, %v541
        %v585 = vsel %vm581, %v564, %v543
        %v587 = vsel %vm581, %v566, %v545
        %v589 = vsel %vm581, %v568, %v547
        %v591 = vsel %vm581, %v570, %v549
        %v593 = vsel %vm581, %v572, %v551
        %v595 = vsel %vm581, %v574, %v553
        %v597 = vsel %vm581, %v576, %v555
        %v599 = vsel %vm581, %v578, %v557
        %v601 = vsel %vm581, %v580, %v559
        %v602 = vld [vmem:[%s1] sm:$0xf]
        %v603 = vld [vmem:[%s1 + $0x4] sm:$0x3]
        %v606 = vunpack.c.l.b16 %v282
        %v607 = vunpack.c.l.b16 %v283
        %v608 = vpack.c.b16 %v607, %v606
        %v610 = vunpack.c.l.b16 %v284
        %v611 = vpack.c.b16 %v610, %v610
        %v613 = vshrl.u32 %v608, 16
        %v615 = vshll.u32 %v608, 16
        %v617 = vrot.slane %v615, 1
        %v618 = vor.u32 %v613, %v617
        %v620 = vshll.u32 %v611, 16
        %v622 = vrot.slane %v620, 1
        %v623 = vsel %vm368, %v618, %v622
        %624 = vrot.lane.b32.xlu0 %v623, 4
        %v625 = vpop.permute.xlu0 %624
        %v626 = vrot.slane %v608, 1
        %v627 = vrot.slane %v611, 1
        %v628 = vsel %vm509, %v626, %v627
        %629 = vrot.lane.b32.xlu0 %v628, 8
        %v630 = vpop.permute.xlu0 %629
        %v632 = vsel %vm560, %v608, %v625
        %v634 = vsel %vm581, %v632, %v630
        %s635 = scalar_lea.vmem %s1, 8
        %v636 = vld [vmem:[%s635] sm:$0xf]
        %v637 = vld [vmem:[%s635 + $0x4] sm:$0x3]
        %v640 = vunpack.c.l.b16 %v636
        %v641 = vunpack.c.l.b16 %v637
        %v642 = vpack.c.b16 %v641, %v640
        %vm643 = vcmask 97280
        %v644 = vsel %vm643, %v585, 0
        %v646 = vsel %vm643, %v587, 0
        %v648 = vsel %vm643, %v589, 0
        %v650 = vsel %vm643, %v591, 0
        %v652 = vsel %vm643, %v593, 0
        %v654 = vsel %vm643, %v595, 0
        %v656 = vsel %vm643, %v597, 0
        %v658 = vsel %vm643, %v599, 0
        %v660 = vsel %vm643, %v601, 0
        %v662 = vsel %vm643, %v634, 0
        %vm664 = vcmask 1045504
        %v666 = vsel %vm664, %v642, 0
        %668 = vmatpush.bf16.msra.mxu0 0
        %669 = vmatpush.bf16.msra.mxu0 0
        %670 = vmatpush.bf16.msra.mxu0 0
        %671 = vmatpush.bf16.msra.mxu0 0
        %672 = vmatpush.bf16.msra.mxu0 0
        %673 = vmatpush.bf16.msra.mxu0 0
        %674 = vmatpush.bf16.msra.mxu0 0
        %675 = vmatpush.bf16.msra.mxu0 %v666
        %676 = vmatmul.bf16.gmra.mxu0 %v644
        %v677 = vpop.f32.mrf.mxu0
        %v678 = vadd.f32 0.0, %v677
        %v679 = vpop.f32.mrf.mxu0
        %v680 = vadd.f32 0.0, %v679
        %681 = vmatmul.bf16.gmra.mxu0 %v646
        %v682 = vpop.f32.mrf.mxu0
        %v683 = vadd.f32 0.0, %v682
        %v684 = vpop.f32.mrf.mxu0
        %v685 = vadd.f32 0.0, %v684
        %686 = vmatmul.bf16.gmra.mxu0 %v648
        %v687 = vpop.f32.mrf.mxu0
        %v688 = vadd.f32 0.0, %v687
        %v689 = vpop.f32.mrf.mxu0
        %v690 = vadd.f32 0.0, %v689
        %691 = vmatmul.bf16.gmra.mxu0 %v650
        %v692 = vpop.f32.mrf.mxu0
        %v693 = vadd.f32 0.0, %v692
        %v694 = vpop.f32.mrf.mxu0
        %v695 = vadd.f32 0.0, %v694
        %696 = vmatmul.bf16.gmra.mxu0 %v652
        %v697 = vpop.f32.mrf.mxu0
        %v698 = vadd.f32 0.0, %v697
        %v699 = vpop.f32.mrf.mxu0
        %v700 = vadd.f32 0.0, %v699
        %701 = vmatmul.bf16.gmra.mxu0 %v654
        %v702 = vpop.f32.mrf.mxu0
        %v703 = vadd.f32 0.0, %v702
        %v704 = vpop.f32.mrf.mxu0
        %v705 = vadd.f32 0.0, %v704
        %706 = vmatmul.bf16.gmra.mxu0 %v656
        %v707 = vpop.f32.mrf.mxu0
        %v708 = vadd.f32 0.0, %v707
        %v709 = vpop.f32.mrf.mxu0
        %v710 = vadd.f32 0.0, %v709
        %711 = vmatmul.bf16.gmra.mxu0 %v658
        %v712 = vpop.f32.mrf.mxu0
        %v713 = vadd.f32 0.0, %v712
        %v714 = vpop.f32.mrf.mxu0
        %v715 = vadd.f32 0.0, %v714
        %716 = vmatmul.bf16.gmra.mxu0 %v660
        %v717 = vpop.f32.mrf.mxu0
        %v718 = vadd.f32 0.0, %v717
        %v719 = vpop.f32.mrf.mxu0
        %v720 = vadd.f32 0.0, %v719
        %721 = vmatmul.bf16.gmra.mxu0 %v662
        %v722 = vpop.f32.mrf.mxu0
        %v723 = vadd.f32 0.0, %v722
        %v724 = vpop.f32.mrf.mxu0
        %v725 = vadd.f32 0.0, %v724
        %726 = vdwg.mxu0
        %v729 = vunpack.c.l.b16 %v602
        %v730 = vunpack.c.l.b16 %v603
        %v731 = vpack.c.b16 %v730, %v729
        %v732 = vsel %vm643, %v583, 0
        %v735 = vsel %vm664, %v731, 0
        %737 = vmatpush.bf16.msra.mxu0 0
        %738 = vmatpush.bf16.msra.mxu0 0
        %739 = vmatpush.bf16.msra.mxu0 0
        %740 = vmatpush.bf16.msra.mxu0 0
        %741 = vmatpush.bf16.msra.mxu0 0
        %742 = vmatpush.bf16.msra.mxu0 0
        %743 = vmatpush.bf16.msra.mxu0 0
        %744 = vmatpush.bf16.msra.mxu0 %v735
        %745 = vmatmul.bf16.gmra.mxu0 %v732
        %v746 = vpop.f32.mrf.mxu0
        %v747 = vadd.f32 %v678, %v746
        %v748 = vpop.f32.mrf.mxu0
        %v749 = vadd.f32 %v680, %v748
        %750 = vmatmul.bf16.gmra.mxu0 %v644
        %v751 = vpop.f32.mrf.mxu0
        %v752 = vadd.f32 %v683, %v751
        %v753 = vpop.f32.mrf.mxu0
        %v754 = vadd.f32 %v685, %v753
        %755 = vmatmul.bf16.gmra.mxu0 %v646
        %v756 = vpop.f32.mrf.mxu0
        %v757 = vadd.f32 %v688, %v756
        %v758 = vpop.f32.mrf.mxu0
        %v759 = vadd.f32 %v690, %v758
        %760 = vmatmul.bf16.gmra.mxu0 %v648
        %v761 = vpop.f32.mrf.mxu0
        %v762 = vadd.f32 %v693, %v761
        %v763 = vpop.f32.mrf.mxu0
        %v764 = vadd.f32 %v695, %v763
        %765 = vmatmul.bf16.gmra.mxu0 %v650
        %v766 = vpop.f32.mrf.mxu0
        %v767 = vadd.f32 %v698, %v766
        %v768 = vpop.f32.mrf.mxu0
        %v769 = vadd.f32 %v700, %v768
        %770 = vmatmul.bf16.gmra.mxu0 %v652
        %v771 = vpop.f32.mrf.mxu0
        %v772 = vadd.f32 %v703, %v771
        %v773 = vpop.f32.mrf.mxu0
        %v774 = vadd.f32 %v705, %v773
        %775 = vmatmul.bf16.gmra.mxu0 %v654
        %v776 = vpop.f32.mrf.mxu0
        %v777 = vadd.f32 %v708, %v776
        %v778 = vpop.f32.mrf.mxu0
        %v779 = vadd.f32 %v710, %v778
        %780 = vmatmul.bf16.gmra.mxu0 %v656
        %v781 = vpop.f32.mrf.mxu0
        %v782 = vadd.f32 %v713, %v781
        %v783 = vpop.f32.mrf.mxu0
        %v784 = vadd.f32 %v715, %v783
        %785 = vmatmul.bf16.gmra.mxu0 %v658
        %v786 = vpop.f32.mrf.mxu0
        %v787 = vadd.f32 %v718, %v786
        %v788 = vpop.f32.mrf.mxu0
        %v789 = vadd.f32 %v720, %v788
        %790 = vmatmul.bf16.gmra.mxu0 %v660
        %v791 = vpop.f32.mrf.mxu0
        %v792 = vadd.f32 %v723, %v791
        %v793 = vpop.f32.mrf.mxu0
        %v794 = vadd.f32 %v725, %v793
        %795 = vdwg.mxu0
        %v798 = vunpack.c.l.b16 %v285
        %v799 = vunpack.c.l.b16 %v286
        %v800 = vpack.c.b16 %v799, %v798
        %v802 = vunpack.c.l.b16 %v287
        %v803 = vpack.c.b16 %v802, %v802
        %v805 = vshrl.u32 %v800, 16
        %v807 = vshll.u32 %v800, 16
        %v809 = vrot.slane %v807, 1
        %v810 = vor.u32 %v805, %v809
        %v812 = vshll.u32 %v803, 16
        %v814 = vrot.slane %v812, 1
        %v815 = vsel %vm368, %v810, %v814
        %816 = vrot.lane.b32.xlu0 %v815, 4
        %v817 = vpop.permute.xlu0 %816
        %v818 = vrot.slane %v800, 1
        %v819 = vrot.slane %v803, 1
        %v820 = vsel %vm509, %v818, %v819
        %821 = vrot.lane.b32.xlu0 %v820, 8
        %v822 = vpop.permute.xlu0 %821
        %v824 = vsel %vm560, %v800, %v817
        %v826 = vsel %vm581, %v824, %v822
        %s827 = scalar_lea.vmem %s1, 16
        %v828 = vld [vmem:[%s827] sm:$0xf]
        %v829 = vld [vmem:[%s827 + $0x4] sm:$0x3]
        %v832 = vunpack.c.l.b16 %v828
        %v833 = vunpack.c.l.b16 %v829
        %v834 = vpack.c.b16 %v833, %v832
        %v835 = vsel %vm643, %v826, 0
        %v838 = vsel %vm664, %v834, 0
        %840 = vmatpush.bf16.msra.mxu0 0
        %841 = vmatpush.bf16.msra.mxu0 0
        %842 = vmatpush.bf16.msra.mxu0 0
        %843 = vmatpush.bf16.msra.mxu0 0
        %844 = vmatpush.bf16.msra.mxu0 0
        %845 = vmatpush.bf16.msra.mxu0 0
        %846 = vmatpush.bf16.msra.mxu0 0
        %847 = vmatpush.bf16.msra.mxu0 %v838
        %848 = vmatmul.bf16.gmra.mxu0 %v646
        %v849 = vpop.f32.mrf.mxu0
        %v850 = vadd.f32 0.0, %v849
        %v851 = vpop.f32.mrf.mxu0
        %v852 = vadd.f32 0.0, %v851
        %853 = vmatmul.bf16.gmra.mxu0 %v648
        %v854 = vpop.f32.mrf.mxu0
        %v855 = vadd.f32 0.0, %v854
        %v856 = vpop.f32.mrf.mxu0
        %v857 = vadd.f32 0.0, %v856
        %858 = vmatmul.bf16.gmra.mxu0 %v650
        %v859 = vpop.f32.mrf.mxu0
        %v860 = vadd.f32 0.0, %v859
        %v861 = vpop.f32.mrf.mxu0
        %v862 = vadd.f32 0.0, %v861
        %863 = vmatmul.bf16.gmra.mxu0 %v652
        %v864 = vpop.f32.mrf.mxu0
        %v865 = vadd.f32 0.0, %v864
        %v866 = vpop.f32.mrf.mxu0
        %v867 = vadd.f32 0.0, %v866
        %868 = vmatmul.bf16.gmra.mxu0 %v654
        %v869 = vpop.f32.mrf.mxu0
        %v870 = vadd.f32 0.0, %v869
        %v871 = vpop.f32.mrf.mxu0
        %v872 = vadd.f32 0.0, %v871
        %873 = vmatmul.bf16.gmra.mxu0 %v656
        %v874 = vpop.f32.mrf.mxu0
        %v875 = vadd.f32 0.0, %v874
        %v876 = vpop.f32.mrf.mxu0
        %v877 = vadd.f32 0.0, %v876
        %878 = vmatmul.bf16.gmra.mxu0 %v658
        %v879 = vpop.f32.mrf.mxu0
        %v880 = vadd.f32 0.0, %v879
        %v881 = vpop.f32.mrf.mxu0
        %v882 = vadd.f32 0.0, %v881
        %883 = vmatmul.bf16.gmra.mxu0 %v660
        %v884 = vpop.f32.mrf.mxu0
        %v885 = vadd.f32 0.0, %v884
        %v886 = vpop.f32.mrf.mxu0
        %v887 = vadd.f32 0.0, %v886
        %888 = vmatmul.bf16.gmra.mxu0 %v662
        %v889 = vpop.f32.mrf.mxu0
        %v890 = vadd.f32 0.0, %v889
        %v891 = vpop.f32.mrf.mxu0
        %v892 = vadd.f32 0.0, %v891
        %893 = vmatmul.bf16.gmra.mxu0 %v835
        %v894 = vpop.f32.mrf.mxu0
        %v895 = vadd.f32 0.0, %v894
        %v896 = vpop.f32.mrf.mxu0
        %v897 = vadd.f32 0.0, %v896
        %898 = vdwg.mxu0
        %v899 = vadd.f32 %v747, %v850
        %v900 = vadd.f32 %v749, %v852
        %v901 = vadd.f32 %v752, %v855
        %v902 = vadd.f32 %v754, %v857
        %v903 = vadd.f32 %v757, %v860
        %v904 = vadd.f32 %v759, %v862
        %v905 = vadd.f32 %v762, %v865
        %v906 = vadd.f32 %v764, %v867
        %v907 = vadd.f32 %v767, %v870
        %v908 = vadd.f32 %v769, %v872
        %v909 = vadd.f32 %v772, %v875
        %v910 = vadd.f32 %v774, %v877
        %v911 = vadd.f32 %v777, %v880
        %v912 = vadd.f32 %v779, %v882
        %v913 = vadd.f32 %v782, %v885
        %v914 = vadd.f32 %v784, %v887
        %v915 = vadd.f32 %v787, %v890
        %v916 = vadd.f32 %v789, %v892
        %v917 = vadd.f32 %v792, %v895
        %v918 = vadd.f32 %v794, %v897
        %v919 = vld [vmem:[%s2] sm:$0x1]
        %v921 = vperm.slane %v919, 0
        %v923 = vadd.f32 %v899, %v921
        %v924 = vadd.f32 %v900, %v921
        %v925 = vadd.f32 %v901, %v921
        %v926 = vadd.f32 %v902, %v921
        %v927 = vadd.f32 %v903, %v921
        %v928 = vadd.f32 %v904, %v921
        %v929 = vadd.f32 %v905, %v921
        %v930 = vadd.f32 %v906, %v921
        %v931 = vadd.f32 %v907, %v921
        %v932 = vadd.f32 %v908, %v921
        %v933 = vadd.f32 %v909, %v921
        %v934 = vadd.f32 %v910, %v921
        %v935 = vadd.f32 %v911, %v921
        %v936 = vadd.f32 %v912, %v921
        %v937 = vadd.f32 %v913, %v921
        %v938 = vadd.f32 %v914, %v921
        %v939 = vadd.f32 %v915, %v921
        %v940 = vadd.f32 %v916, %v921
        %v941 = vadd.f32 %v917, %v921
        %v942 = vadd.f32 %v918, %v921
        %v943 = vmax.f32 %v923, 0.0
        %v944 = vmax.f32 %v924, 0.0
        %v945 = vmax.f32 %v925, 0.0
        %v946 = vmax.f32 %v926, 0.0
        %v947 = vmax.f32 %v927, 0.0
        %v948 = vmax.f32 %v928, 0.0
        %v949 = vmax.f32 %v929, 0.0
        %v950 = vmax.f32 %v930, 0.0
        %v951 = vmax.f32 %v931, 0.0
        %v952 = vmax.f32 %v932, 0.0
        %v953 = vmax.f32 %v933, 0.0
        %v954 = vmax.f32 %v934, 0.0
        %v955 = vmax.f32 %v935, 0.0
        %v956 = vmax.f32 %v936, 0.0
        %v957 = vmax.f32 %v937, 0.0
        %v958 = vmax.f32 %v938, 0.0
        %v959 = vmax.f32 %v939, 0.0
        %v960 = vmax.f32 %v940, 0.0
        %v961 = vmax.f32 %v941, 0.0
        %v962 = vmax.f32 %v942, 0.0
        %vm963 = vcmask 57344
        %vm964 = vsmask.f32 256
        %vm965 = vmand %vm963, %vm964
        %v966 = vld [vmem:[#allocation2] sm:$0x1]
        %v967 = vsel %vm965, 0, %v966
        %968 = vst [vmem:[#allocation2] sm:$0x1] %v967
        %v969 = vld [vmem:[#allocation2 + $0xc] sm:$0x1]
        %v970 = vsel %vm965, 0, %v969
        %971 = vst [vmem:[#allocation2 + $0xc] sm:$0x1] %v970
        %v972 = vld [vmem:[#allocation2 + $0x18] sm:$0x1]
        %v973 = vsel %vm965, 0, %v972
        %974 = vst [vmem:[#allocation2 + $0x18] sm:$0x1] %v973
        %v975 = vld [vmem:[#allocation2 + $0x24] sm:$0x1]
        %v976 = vsel %vm965, 0, %v975
        %977 = vst [vmem:[#allocation2 + $0x24] sm:$0x1] %v976
        %v978 = vld [vmem:[#allocation2 + $0x30] sm:$0x1]
        %v979 = vsel %vm965, 0, %v978
        %980 = vst [vmem:[#allocation2 + $0x30] sm:$0x1] %v979
        %v981 = vld [vmem:[#allocation2 + $0x3c] sm:$0x1]
        %v982 = vsel %vm965, 0, %v981
        %983 = vst [vmem:[#allocation2 + $0x3c] sm:$0x1] %v982
        %v984 = vld [vmem:[#allocation2 + $0x48] sm:$0x1]
        %v985 = vsel %vm965, 0, %v984
        %986 = vst [vmem:[#allocation2 + $0x48] sm:$0x1] %v985
        %v987 = vld [vmem:[#allocation2 + $0x54] sm:$0x1]
        %v988 = vsel %vm965, 0, %v987
        %989 = vst [vmem:[#allocation2 + $0x54] sm:$0x1] %v988
        %v990 = vld [vmem:[#allocation2 + $0x60] sm:$0x1]
        %v991 = vsel %vm965, 0, %v990
        %992 = vst [vmem:[#allocation2 + $0x60] sm:$0x1] %v991
        %v993 = vld [vmem:[#allocation2 + $0x6c] sm:$0x1]
        %v994 = vsel %vm965, 0, %v993
        %995 = vst [vmem:[#allocation2 + $0x6c] sm:$0x1] %v994
        %vm996 = vsmask.f32 7938
        %vm997 = vmand %vm963, %vm996
        %v998 = vld [vmem:[#allocation2 + $0x8] sm:$0x1]
        %v999 = vsel %vm997, 0, %v998
        %1000 = vst [vmem:[#allocation2 + $0x8] sm:$0x1] %v999
        %v1001 = vld [vmem:[#allocation2 + $0x14] sm:$0x1]
        %v1002 = vsel %vm997, 0, %v1001
        %1003 = vst [vmem:[#allocation2 + $0x14] sm:$0x1] %v1002
        %v1004 = vld [vmem:[#allocation2 + $0x20] sm:$0x1]
        %v1005 = vsel %vm997, 0, %v1004
        %1006 = vst [vmem:[#allocation2 + $0x20] sm:$0x1] %v1005
        %v1007 = vld [vmem:[#allocation2 + $0x2c] sm:$0x1]
        %v1008 = vsel %vm997, 0, %v1007
        %1009 = vst [vmem:[#allocation2 + $0x2c] sm:$0x1] %v1008
        %v1010 = vld [vmem:[#allocation2 + $0x38] sm:$0x1]
        %v1011 = vsel %vm997, 0, %v1010
        %1012 = vst [vmem:[#allocation2 + $0x38] sm:$0x1] %v1011
        %v1013 = vld [vmem:[#allocation2 + $0x44] sm:$0x1]
        %v1014 = vsel %vm997, 0, %v1013
        %1015 = vst [vmem:[#allocation2 + $0x44] sm:$0x1] %v1014
        %v1016 = vld [vmem:[#allocation2 + $0x50] sm:$0x1]
        %v1017 = vsel %vm997, 0, %v1016
        %1018 = vst [vmem:[#allocation2 + $0x50] sm:$0x1] %v1017
        %v1019 = vld [vmem:[#allocation2 + $0x5c] sm:$0x1]
        %v1020 = vsel %vm997, 0, %v1019
        %1021 = vst [vmem:[#allocation2 + $0x5c] sm:$0x1] %v1020
        %v1022 = vld [vmem:[#allocation2 + $0x68] sm:$0x1]
        %v1023 = vsel %vm997, 0, %v1022
        %1024 = vst [vmem:[#allocation2 + $0x68] sm:$0x1] %v1023
        %v1025 = vld [vmem:[#allocation2 + $0x74] sm:$0x1]
        %v1026 = vsel %vm997, 0, %v1025
        %1027 = vst [vmem:[#allocation2 + $0x74] sm:$0x1] %v1026
        %v1028 = vpack.c.bf16 %v943, %v943
        %v1029 = vpack.c.bf16 %v944, %v944
        %v1030 = vpack.c.bf16 %v945, %v945
        %v1031 = vpack.c.bf16 %v946, %v946
        %v1032 = vpack.c.bf16 %v947, %v947
        %v1033 = vpack.c.bf16 %v948, %v948
        %v1034 = vpack.c.bf16 %v949, %v949
        %v1035 = vpack.c.bf16 %v950, %v950
        %v1036 = vpack.c.bf16 %v951, %v951
        %v1037 = vpack.c.bf16 %v952, %v952
        %v1038 = vpack.c.bf16 %v953, %v953
        %v1039 = vpack.c.bf16 %v954, %v954
        %v1040 = vpack.c.bf16 %v955, %v955
        %v1041 = vpack.c.bf16 %v956, %v956
        %v1042 = vpack.c.bf16 %v957, %v957
        %v1043 = vpack.c.bf16 %v958, %v958
        %v1044 = vpack.c.bf16 %v959, %v959
        %v1045 = vpack.c.bf16 %v960, %v960
        %v1046 = vpack.c.bf16 %v961, %v961
        %v1047 = vpack.c.bf16 %v962, %v962
        %vm1048 = vsmask.f32 4368
        %vm1049 = vmor %vm964, %vm1048
        %v1051 = vshrl.u32 %v1028, 16
        %v1053 = vrot.slane %v1051, 7
        %v1054 = vshll.u32 %v1028, 16
        %v1056 = vor.u32 %v1053, %v1054
        %v1057 = vrot.slane %v1053, 4
        %v1059 = vshrl.u32 %v1029, 16
        %v1061 = vrot.slane %v1059, 7
        %v1062 = vshll.u32 %v1029, 16
        %v1064 = vor.u32 %v1061, %v1062
        %v1065 = vsel %vm1049, %v1057, %v1064
        %v1066 = vrot.slane %v1061, 4
        %v1068 = vshrl.u32 %v1030, 16
        %v1070 = vrot.slane %v1068, 7
        %v1071 = vshll.u32 %v1030, 16
        %v1073 = vor.u32 %v1070, %v1071
        %v1074 = vrot.slane %v1070, 4
        %v1076 = vshrl.u32 %v1031, 16
        %v1078 = vrot.slane %v1076, 7
        %v1079 = vshll.u32 %v1031, 16
        %v1081 = vor.u32 %v1078, %v1079
        %v1082 = vsel %vm1049, %v1074, %v1081
        %v1083 = vrot.slane %v1078, 4
        %v1085 = vshrl.u32 %v1032, 16
        %v1087 = vrot.slane %v1085, 7
        %v1088 = vshll.u32 %v1032, 16
        %v1090 = vor.u32 %v1087, %v1088
        %v1091 = vrot.slane %v1087, 4
        %v1093 = vshrl.u32 %v1033, 16
        %v1095 = vrot.slane %v1093, 7
        %v1096 = vshll.u32 %v1033, 16
        %v1098 = vor.u32 %v1095, %v1096
        %v1099 = vsel %vm1049, %v1091, %v1098
        %v1100 = vrot.slane %v1095, 4
        %v1102 = vshrl.u32 %v1034, 16
        %v1104 = vrot.slane %v1102, 7
        %v1105 = vshll.u32 %v1034, 16
        %v1107 = vor.u32 %v1104, %v1105
        %v1108 = vrot.slane %v1104, 4
        %v1110 = vshrl.u32 %v1035, 16
        %v1112 = vrot.slane %v1110, 7
        %v1113 = vshll.u32 %v1035, 16
        %v1115 = vor.u32 %v1112, %v1113
        %v1116 = vsel %vm1049, %v1108, %v1115
        %v1117 = vrot.slane %v1112, 4
        %v1119 = vshrl.u32 %v1036, 16
        %v1121 = vrot.slane %v1119, 7
        %v1122 = vshll.u32 %v1036, 16
        %v1124 = vor.u32 %v1121, %v1122
        %v1125 = vrot.slane %v1121, 4
        %v1127 = vshrl.u32 %v1037, 16
        %v1129 = vrot.slane %v1127, 7
        %v1130 = vshll.u32 %v1037, 16
        %v1132 = vor.u32 %v1129, %v1130
        %v1133 = vsel %vm1049, %v1125, %v1132
        %v1134 = vrot.slane %v1129, 4
        %v1136 = vshrl.u32 %v1038, 16
        %v1138 = vrot.slane %v1136, 7
        %v1139 = vshll.u32 %v1038, 16
        %v1141 = vor.u32 %v1138, %v1139
        %v1142 = vrot.slane %v1138, 4
        %v1144 = vshrl.u32 %v1039, 16
        %v1146 = vrot.slane %v1144, 7
        %v1147 = vshll.u32 %v1039, 16
        %v1149 = vor.u32 %v1146, %v1147
        %v1150 = vsel %vm1049, %v1142, %v1149
        %v1151 = vrot.slane %v1146, 4
        %v1153 = vshrl.u32 %v1040, 16
        %v1155 = vrot.slane %v1153, 7
        %v1156 = vshll.u32 %v1040, 16
        %v1158 = vor.u32 %v1155, %v1156
        %v1159 = vrot.slane %v1155, 4
        %v1161 = vshrl.u32 %v1041, 16
        %v1163 = vrot.slane %v1161, 7
        %v1164 = vshll.u32 %v1041, 16
        %v1166 = vor.u32 %v1163, %v1164
        %v1167 = vsel %vm1049, %v1159, %v1166
        %v1168 = vrot.slane %v1163, 4
        %v1170 = vshrl.u32 %v1042, 16
        %v1172 = vrot.slane %v1170, 7
        %v1173 = vshll.u32 %v1042, 16
        %v1175 = vor.u32 %v1172, %v1173
        %v1176 = vrot.slane %v1172, 4
        %v1178 = vshrl.u32 %v1043, 16
        %v1180 = vrot.slane %v1178, 7
        %v1181 = vshll.u32 %v1043, 16
        %v1183 = vor.u32 %v1180, %v1181
        %v1184 = vsel %vm1049, %v1176, %v1183
        %v1185 = vrot.slane %v1180, 4
        %v1187 = vshrl.u32 %v1044, 16
        %v1189 = vrot.slane %v1187, 7
        %v1190 = vshll.u32 %v1044, 16
        %v1192 = vor.u32 %v1189, %v1190
        %v1193 = vrot.slane %v1189, 4
        %v1195 = vshrl.u32 %v1045, 16
        %v1197 = vrot.slane %v1195, 7
        %v1198 = vshll.u32 %v1045, 16
        %v1200 = vor.u32 %v1197, %v1198
        %v1201 = vsel %vm1049, %v1193, %v1200
        %v1202 = vrot.slane %v1197, 4
        %v1204 = vshrl.u32 %v1046, 16
        %v1206 = vrot.slane %v1204, 7
        %v1207 = vshll.u32 %v1046, 16
        %v1209 = vor.u32 %v1206, %v1207
        %v1210 = vrot.slane %v1206, 4
        %v1212 = vshrl.u32 %v1047, 16
        %v1214 = vrot.slane %v1212, 7
        %v1215 = vshll.u32 %v1047, 16
        %v1217 = vor.u32 %v1214, %v1215
        %v1218 = vsel %vm1049, %v1210, %v1217
        %v1219 = vrot.slane %v1214, 4
        %vm1250 = vcmask 60416
        %vm1251 = vmand %vm1250, %vm996
        %v1252 = vld [vmem:[#allocation2] sm:$0xf]
        %v1253 = vsel %vm1251, %v1056, %v1252
        %1254 = vst [vmem:[#allocation2] sm:$0xf] %v1253
        %vm1255 = vcmask 60416
        %1256 = vst.msk [vmem:[#allocation2 + $0x4] sm:$0xf] %vm1255, %v1065
        %v1257 = vld [vmem:[#allocation2 + $0x8] sm:$0x1]
        %v1258 = vsel %vm965, %v1066, %v1257
        %1259 = vst [vmem:[#allocation2 + $0x8] sm:$0x1] %v1258
        %v1260 = vld [vmem:[#allocation2 + $0xc] sm:$0xf]
        %v1261 = vsel %vm1251, %v1073, %v1260
        %1262 = vst [vmem:[#allocation2 + $0xc] sm:$0xf] %v1261
        %1263 = vst.msk [vmem:[#allocation2 + $0x10] sm:$0xf] %vm1255, %v1082
        %v1264 = vld [vmem:[#allocation2 + $0x14] sm:$0x1]
        %v1265 = vsel %vm965, %v1083, %v1264
        %1266 = vst [vmem:[#allocation2 + $0x14] sm:$0x1] %v1265
        %v1267 = vld [vmem:[#allocation2 + $0x18] sm:$0xf]
        %v1268 = vsel %vm1251, %v1090, %v1267
        %1269 = vst [vmem:[#allocation2 + $0x18] sm:$0xf] %v1268
        %1270 = vst.msk [vmem:[#allocation2 + $0x1c] sm:$0xf] %vm1255, %v1099
        %v1271 = vld [vmem:[#allocation2 + $0x20] sm:$0x1]
        %v1272 = vsel %vm965, %v1100, %v1271
        %1273 = vst [vmem:[#allocation2 + $0x20] sm:$0x1] %v1272
        %v1274 = vld [vmem:[#allocation2 + $0x24] sm:$0xf]
        %v1275 = vsel %vm1251, %v1107, %v1274
        %1276 = vst [vmem:[#allocation2 + $0x24] sm:$0xf] %v1275
        %1277 = vst.msk [vmem:[#allocation2 + $0x28] sm:$0xf] %vm1255, %v1116
        %v1278 = vld [vmem:[#allocation2 + $0x2c] sm:$0x1]
        %v1279 = vsel %vm965, %v1117, %v1278
        %1280 = vst [vmem:[#allocation2 + $0x2c] sm:$0x1] %v1279
        %v1281 = vld [vmem:[#allocation2 + $0x30] sm:$0xf]
        %v1282 = vsel %vm1251, %v1124, %v1281
        %1283 = vst [vmem:[#allocation2 + $0x30] sm:$0xf] %v1282
        %1284 = vst.msk [vmem:[#allocation2 + $0x34] sm:$0xf] %vm1255, %v1133
        %v1285 = vld [vmem:[#allocation2 + $0x38] sm:$0x1]
        %v1286 = vsel %vm965, %v1134, %v1285
        %1287 = vst [vmem:[#allocation2 + $0x38] sm:$0x1] %v1286
        %v1288 = vld [vmem:[#allocation2 + $0x3c] sm:$0xf]
        %v1289 = vsel %vm1251, %v1141, %v1288
        %1290 = vst [vmem:[#allocation2 + $0x3c] sm:$0xf] %v1289
        %1291 = vst.msk [vmem:[#allocation2 + $0x40] sm:$0xf] %vm1255, %v1150
        %v1292 = vld [vmem:[#allocation2 + $0x44] sm:$0x1]
        %v1293 = vsel %vm965, %v1151, %v1292
        %1294 = vst [vmem:[#allocation2 + $0x44] sm:$0x1] %v1293
        %v1295 = vld [vmem:[#allocation2 + $0x48] sm:$0xf]
        %v1296 = vsel %vm1251, %v1158, %v1295
        %1297 = vst [vmem:[#allocation2 + $0x48] sm:$0xf] %v1296
        %1298 = vst.msk [vmem:[#allocation2 + $0x4c] sm:$0xf] %vm1255, %v1167
        %v1299 = vld [vmem:[#allocation2 + $0x50] sm:$0x1]
        %v1300 = vsel %vm965, %v1168, %v1299
        %1301 = vst [vmem:[#allocation2 + $0x50] sm:$0x1] %v1300
        %v1302 = vld [vmem:[#allocation2 + $0x54] sm:$0xf]
        %v1303 = vsel %vm1251, %v1175, %v1302
        %1304 = vst [vmem:[#allocation2 + $0x54] sm:$0xf] %v1303
        %1305 = vst.msk [vmem:[#allocation2 + $0x58] sm:$0xf] %vm1255, %v1184
        %v1306 = vld [vmem:[#allocation2 + $0x5c] sm:$0x1]
        %v1307 = vsel %vm965, %v1185, %v1306
        %1308 = vst [vmem:[#allocation2 + $0x5c] sm:$0x1] %v1307
        %v1309 = vld [vmem:[#allocation2 + $0x60] sm:$0xf]
        %v1310 = vsel %vm1251, %v1192, %v1309
        %1311 = vst [vmem:[#allocation2 + $0x60] sm:$0xf] %v1310
        %1312 = vst.msk [vmem:[#allocation2 + $0x64] sm:$0xf] %vm1255, %v1201
        %v1313 = vld [vmem:[#allocation2 + $0x68] sm:$0x1]
        %v1314 = vsel %vm965, %v1202, %v1313
        %1315 = vst [vmem:[#allocation2 + $0x68] sm:$0x1] %v1314
        %v1316 = vld [vmem:[#allocation2 + $0x6c] sm:$0xf]
        %v1317 = vsel %vm1251, %v1209, %v1316
        %1318 = vst [vmem:[#allocation2 + $0x6c] sm:$0xf] %v1317
        %1319 = vst.msk [vmem:[#allocation2 + $0x70] sm:$0xf] %vm1255, %v1218
        %v1320 = vld [vmem:[#allocation2 + $0x74] sm:$0x1]
        %v1321 = vsel %vm965, %v1219, %v1320
        %1322 = vst [vmem:[#allocation2 + $0x74] sm:$0x1] %v1321
        %p1323 = scmp.eq.s32.totalorder %s24, 0
        // Predicated region
        $region41: #{tpu_custom_call.1} parent=39 // pred_check
          %p1324 = pneg %p1323
        $region42: #{tpu_custom_call.1} parent=39 // pred_check_branch
          %1326 = sbr.rel (%p1324) target = $region44
        $region43: #{tpu_custom_call.1} parent=39 // pred_region
          %1327 = vst.msk [vmem:[#allocation2] sm:$0xf] %vm1255, 0
          %1328 = vst.msk [vmem:[#allocation2 + $0x4] sm:$0xf] %vm1255, 0
          %vm1329 = vcmask 57344
          %1330 = vst.msk [vmem:[#allocation2 + $0x8] sm:$0x1] %vm1329, 0
        $region44: #{tpu_custom_call.1} parent=39 // pred_fallthru
          _
        %p1331 = scmp.eq.s32.totalorder %s24, 1
        // Predicated region
        $region45: #{tpu_custom_call.1} parent=39 // pred_check
          %p1332 = pneg %p1331
        $region46: #{tpu_custom_call.1} parent=39 // pred_check_branch
          %1334 = sbr.rel (%p1332) target = $region48
        $region47: #{tpu_custom_call.1} parent=39 // pred_region
          %s1335 = scalar_lea.vmem [#allocation2], 108
          %1336 = vst.msk [vmem:[%s1335] sm:$0xf] %vm1255, 0
          %1337 = vst.msk [vmem:[%s1335 + $0x4] sm:$0xf] %vm1255, 0
          %vm1338 = vcmask 57344
          %1339 = vst.msk [vmem:[%s1335 + $0x8] sm:$0x1] %vm1338, 0
        $region48: #{tpu_custom_call.1} parent=39 // pred_fallthru
          _
        %v1340 = vld [vmem:[#allocation2] sm:$0xf]
        %v1341 = vld [vmem:[#allocation2 + $0x4] sm:$0xf]
        %v1342 = vld [vmem:[#allocation2 + $0xc] sm:$0xf]
        %v1343 = vld [vmem:[#allocation2 + $0x10] sm:$0xf]
        %v1344 = vld [vmem:[#allocation2 + $0x18] sm:$0xf]
        %v1345 = vld [vmem:[#allocation2 + $0x1c] sm:$0xf]
        %v1346 = vld [vmem:[#allocation2 + $0x24] sm:$0xf]
        %v1347 = vld [vmem:[#allocation2 + $0x28] sm:$0xf]
        %v1348 = vld [vmem:[#allocation2 + $0x30] sm:$0xf]
        %v1349 = vld [vmem:[#allocation2 + $0x34] sm:$0xf]
        %v1350 = vld [vmem:[#allocation2 + $0x3c] sm:$0xf]
        %v1351 = vld [vmem:[#allocation2 + $0x40] sm:$0xf]
        %v1352 = vld [vmem:[#allocation2 + $0x48] sm:$0xf]
        %v1353 = vld [vmem:[#allocation2 + $0x4c] sm:$0xf]
        %v1354 = vld [vmem:[#allocation2 + $0x54] sm:$0xf]
        %v1355 = vld [vmem:[#allocation2 + $0x58] sm:$0xf]
        %v1356 = vld [vmem:[#allocation2 + $0x8] sm:$0x1]
        %v1357 = vld [vmem:[#allocation2 + $0x14] sm:$0x1]
        %v1358 = vld [vmem:[#allocation2 + $0x20] sm:$0x1]
        %v1359 = vld [vmem:[#allocation2 + $0x2c] sm:$0x1]
        %v1360 = vld [vmem:[#allocation2 + $0x38] sm:$0x1]
        %v1361 = vld [vmem:[#allocation2 + $0x44] sm:$0x1]
        %v1362 = vld [vmem:[#allocation2 + $0x50] sm:$0x1]
        %v1363 = vld [vmem:[#allocation2 + $0x5c] sm:$0x1]
        %v1364 = vld [vmem:[#allocation2] sm:$0xe]
        %v1365 = vld [vmem:[#allocation2 + $0xc] sm:$0xe]
        %v1366 = vld [vmem:[#allocation2 + $0x18] sm:$0xe]
        %v1367 = vld [vmem:[#allocation2 + $0x24] sm:$0xe]
        %v1368 = vld [vmem:[#allocation2 + $0x30] sm:$0xe]
        %v1369 = vld [vmem:[#allocation2 + $0x3c] sm:$0xe]
        %v1370 = vld [vmem:[#allocation2 + $0x48] sm:$0xe]
        %v1371 = vld [vmem:[#allocation2 + $0x54] sm:$0xe]
        %v1388 = vunpack.c.l.b16 %v1340
        %v1389 = vunpack.c.l.b16 %v1341
        %v1390 = vunpack.c.l.b16 %v1342
        %v1391 = vunpack.c.l.b16 %v1343
        %v1392 = vunpack.c.l.b16 %v1344
        %v1393 = vunpack.c.l.b16 %v1345
        %v1394 = vunpack.c.l.b16 %v1346
        %v1395 = vunpack.c.l.b16 %v1347
        %v1396 = vunpack.c.l.b16 %v1348
        %v1397 = vunpack.c.l.b16 %v1349
        %v1398 = vunpack.c.l.b16 %v1350
        %v1399 = vunpack.c.l.b16 %v1351
        %v1400 = vunpack.c.l.b16 %v1352
        %v1401 = vunpack.c.l.b16 %v1353
        %v1402 = vunpack.c.l.b16 %v1354
        %v1403 = vunpack.c.l.b16 %v1355
        %v1404 = vpack.c.b16 %v1389, %v1388
        %v1405 = vpack.c.b16 %v1391, %v1390
        %v1406 = vpack.c.b16 %v1393, %v1392
        %v1407 = vpack.c.b16 %v1395, %v1394
        %v1408 = vpack.c.b16 %v1397, %v1396
        %v1409 = vpack.c.b16 %v1399, %v1398
        %v1410 = vpack.c.b16 %v1401, %v1400
        %v1411 = vpack.c.b16 %v1403, %v1402
        %v1420 = vunpack.c.l.b16 %v1356
        %v1421 = vunpack.c.l.b16 %v1357
        %v1422 = vunpack.c.l.b16 %v1358
        %v1423 = vunpack.c.l.b16 %v1359
        %v1424 = vunpack.c.l.b16 %v1360
        %v1425 = vunpack.c.l.b16 %v1361
        %v1426 = vunpack.c.l.b16 %v1362
        %v1427 = vunpack.c.l.b16 %v1363
        %v1428 = vpack.c.b16 %v1420, %v1420
        %v1429 = vpack.c.b16 %v1421, %v1421
        %v1430 = vpack.c.b16 %v1422, %v1422
        %v1431 = vpack.c.b16 %v1423, %v1423
        %v1432 = vpack.c.b16 %v1424, %v1424
        %v1433 = vpack.c.b16 %v1425, %v1425
        %v1434 = vpack.c.b16 %v1426, %v1426
        %v1435 = vpack.c.b16 %v1427, %v1427
        %v1437 = vshrl.u32 %v1404, 16
        %v1439 = vshll.u32 %v1404, 16
        %v1441 = vrot.slane %v1439, 1
        %v1442 = vor.u32 %v1437, %v1441
        %v1444 = vshll.u32 %v1428, 16
        %v1446 = vrot.slane %v1444, 1
        %v1447 = vsel %vm368, %v1442, %v1446
        %v1449 = vshrl.u32 %v1405, 16
        %v1451 = vshll.u32 %v1405, 16
        %v1453 = vrot.slane %v1451, 1
        %v1454 = vor.u32 %v1449, %v1453
        %v1456 = vshll.u32 %v1429, 16
        %v1458 = vrot.slane %v1456, 1
        %v1459 = vsel %vm368, %v1454, %v1458
        %v1461 = vshrl.u32 %v1406, 16
        %v1463 = vshll.u32 %v1406, 16
        %v1465 = vrot.slane %v1463, 1
        %v1466 = vor.u32 %v1461, %v1465
        %v1468 = vshll.u32 %v1430, 16
        %v1470 = vrot.slane %v1468, 1
        %v1471 = vsel %vm368, %v1466, %v1470
        %v1473 = vshrl.u32 %v1407, 16
        %v1475 = vshll.u32 %v1407, 16
        %v1477 = vrot.slane %v1475, 1
        %v1478 = vor.u32 %v1473, %v1477
        %v1480 = vshll.u32 %v1431, 16
        %v1482 = vrot.slane %v1480, 1
        %v1483 = vsel %vm368, %v1478, %v1482
        %v1485 = vshrl.u32 %v1408, 16
        %v1487 = vshll.u32 %v1408, 16
        %v1489 = vrot.slane %v1487, 1
        %v1490 = vor.u32 %v1485, %v1489
        %v1492 = vshll.u32 %v1432, 16
        %v1494 = vrot.slane %v1492, 1
        %v1495 = vsel %vm368, %v1490, %v1494
        %v1497 = vshrl.u32 %v1409, 16
        %v1499 = vshll.u32 %v1409, 16
        %v1501 = vrot.slane %v1499, 1
        %v1502 = vor.u32 %v1497, %v1501
        %v1504 = vshll.u32 %v1433, 16
        %v1506 = vrot.slane %v1504, 1
        %v1507 = vsel %vm368, %v1502, %v1506
        %v1509 = vshrl.u32 %v1410, 16
        %v1511 = vshll.u32 %v1410, 16
        %v1513 = vrot.slane %v1511, 1
        %v1514 = vor.u32 %v1509, %v1513
        %v1516 = vshll.u32 %v1434, 16
        %v1518 = vrot.slane %v1516, 1
        %v1519 = vsel %vm368, %v1514, %v1518
        %v1521 = vshrl.u32 %v1411, 16
        %v1523 = vshll.u32 %v1411, 16
        %v1525 = vrot.slane %v1523, 1
        %v1526 = vor.u32 %v1521, %v1525
        %v1528 = vshll.u32 %v1435, 16
        %v1530 = vrot.slane %v1528, 1
        %v1531 = vsel %vm368, %v1526, %v1530
        %1532 = vrot.lane.b32.xlu0 %v1447, 8
        %v1533 = vpop.permute.xlu0 %1532
        %1534 = vrot.lane.b32.xlu0 %v1459, 8
        %v1535 = vpop.permute.xlu0 %1534
        %1536 = vrot.lane.b32.xlu0 %v1471, 8
        %v1537 = vpop.permute.xlu0 %1536
        %1538 = vrot.lane.b32.xlu0 %v1483, 8
        %v1539 = vpop.permute.xlu0 %1538
        %1540 = vrot.lane.b32.xlu0 %v1495, 8
        %v1541 = vpop.permute.xlu0 %1540
        %1542 = vrot.lane.b32.xlu0 %v1507, 8
        %v1543 = vpop.permute.xlu0 %1542
        %1544 = vrot.lane.b32.xlu0 %v1519, 8
        %v1545 = vpop.permute.xlu0 %1544
        %1546 = vrot.lane.b32.xlu0 %v1531, 8
        %v1547 = vpop.permute.xlu0 %1546
        %v1556 = vunpack.c.l.b16 %v1364
        %v1557 = vunpack.c.l.b16 %v1365
        %v1558 = vunpack.c.l.b16 %v1366
        %v1559 = vunpack.c.l.b16 %v1367
        %v1560 = vunpack.c.l.b16 %v1368
        %v1561 = vunpack.c.l.b16 %v1369
        %v1562 = vunpack.c.l.b16 %v1370
        %v1563 = vunpack.c.l.b16 %v1371
        %v1564 = vpack.c.b16 %v1389, %v1556
        %v1565 = vpack.c.b16 %v1391, %v1557
        %v1566 = vpack.c.b16 %v1393, %v1558
        %v1567 = vpack.c.b16 %v1395, %v1559
        %v1568 = vpack.c.b16 %v1397, %v1560
        %v1569 = vpack.c.b16 %v1399, %v1561
        %v1570 = vpack.c.b16 %v1401, %v1562
        %v1571 = vpack.c.b16 %v1403, %v1563
        %v1572 = vrot.slane %v1564, 1
        %v1573 = vrot.slane %v1428, 1
        %v1574 = vsel %vm509, %v1572, %v1573
        %v1575 = vrot.slane %v1565, 1
        %v1576 = vrot.slane %v1429, 1
        %v1577 = vsel %vm509, %v1575, %v1576
        %v1578 = vrot.slane %v1566, 1
        %v1579 = vrot.slane %v1430, 1
        %v1580 = vsel %vm509, %v1578, %v1579
        %v1581 = vrot.slane %v1567, 1
        %v1582 = vrot.slane %v1431, 1
        %v1583 = vsel %vm509, %v1581, %v1582
        %v1584 = vrot.slane %v1568, 1
        %v1585 = vrot.slane %v1432, 1
        %v1586 = vsel %vm509, %v1584, %v1585
        %v1587 = vrot.slane %v1569, 1
        %v1588 = vrot.slane %v1433, 1
        %v1589 = vsel %vm509, %v1587, %v1588
        %v1590 = vrot.slane %v1570, 1
        %v1591 = vrot.slane %v1434, 1
        %v1592 = vsel %vm509, %v1590, %v1591
        %v1593 = vrot.slane %v1571, 1
        %v1594 = vrot.slane %v1435, 1
        %v1595 = vsel %vm509, %v1593, %v1594
        %1596 = vrot.lane.b32.xlu0 %v1574, 16
        %v1597 = vpop.permute.xlu0 %1596
        %1598 = vrot.lane.b32.xlu0 %v1577, 16
        %v1599 = vpop.permute.xlu0 %1598
        %1600 = vrot.lane.b32.xlu0 %v1580, 16
        %v1601 = vpop.permute.xlu0 %1600
        %1602 = vrot.lane.b32.xlu0 %v1583, 16
        %v1603 = vpop.permute.xlu0 %1602
        %1604 = vrot.lane.b32.xlu0 %v1586, 16
        %v1605 = vpop.permute.xlu0 %1604
        %1606 = vrot.lane.b32.xlu0 %v1589, 16
        %v1607 = vpop.permute.xlu0 %1606
        %1608 = vrot.lane.b32.xlu0 %v1592, 16
        %v1609 = vpop.permute.xlu0 %1608
        %1610 = vrot.lane.b32.xlu0 %v1595, 16
        %v1611 = vpop.permute.xlu0 %1610
        %v1613 = vsel %vm581, %v1404, %v1533
        %v1615 = vsel %vm581, %v1405, %v1535
        %v1617 = vsel %vm581, %v1406, %v1537
        %v1619 = vsel %vm581, %v1407, %v1539
        %v1621 = vsel %vm581, %v1408, %v1541
        %v1623 = vsel %vm581, %v1409, %v1543
        %v1625 = vsel %vm581, %v1410, %v1545
        %v1627 = vsel %vm581, %v1411, %v1547
        %vm1628 = vcmask 130048
        %v1630 = vsel %vm1628, %v1613, %v1597
        %v1632 = vsel %vm1628, %v1615, %v1599
        %v1634 = vsel %vm1628, %v1617, %v1601
        %v1636 = vsel %vm1628, %v1619, %v1603
        %v1638 = vsel %vm1628, %v1621, %v1605
        %v1640 = vsel %vm1628, %v1623, %v1607
        %v1642 = vsel %vm1628, %v1625, %v1609
        %v1644 = vsel %vm1628, %v1627, %v1611
        %v1645 = vld [vmem:[%s3] sm:$0xf]
        %s1646 = scalar_lea.vmem [#allocation2], 12
        %v1647 = vld [vmem:[%s1646] sm:$0xf]
        %v1648 = vld [vmem:[%s1646 + $0x4] sm:$0xf]
        %v1649 = vld [vmem:[%s1646 + $0xc] sm:$0xf]
        %v1650 = vld [vmem:[%s1646 + $0x10] sm:$0xf]
        %v1651 = vld [vmem:[%s1646 + $0x18] sm:$0xf]
        %v1652 = vld [vmem:[%s1646 + $0x1c] sm:$0xf]
        %v1653 = vld [vmem:[%s1646 + $0x24] sm:$0xf]
        %v1654 = vld [vmem:[%s1646 + $0x28] sm:$0xf]
        %v1655 = vld [vmem:[%s1646 + $0x30] sm:$0xf]
        %v1656 = vld [vmem:[%s1646 + $0x34] sm:$0xf]
        %v1657 = vld [vmem:[%s1646 + $0x3c] sm:$0xf]
        %v1658 = vld [vmem:[%s1646 + $0x40] sm:$0xf]
        %v1659 = vld [vmem:[%s1646 + $0x48] sm:$0xf]
        %v1660 = vld [vmem:[%s1646 + $0x4c] sm:$0xf]
        %v1661 = vld [vmem:[%s1646 + $0x54] sm:$0xf]
        %v1662 = vld [vmem:[%s1646 + $0x58] sm:$0xf]
        %v1663 = vld [vmem:[%s1646 + $0x8] sm:$0x1]
        %v1664 = vld [vmem:[%s1646 + $0x14] sm:$0x1]
        %v1665 = vld [vmem:[%s1646 + $0x20] sm:$0x1]
        %v1666 = vld [vmem:[%s1646 + $0x2c] sm:$0x1]
        %v1667 = vld [vmem:[%s1646 + $0x38] sm:$0x1]
        %v1668 = vld [vmem:[%s1646 + $0x44] sm:$0x1]
        %v1669 = vld [vmem:[%s1646 + $0x50] sm:$0x1]
        %v1670 = vld [vmem:[%s1646 + $0x5c] sm:$0x1]
        %v1671 = vld [vmem:[%s1646] sm:$0xe]
        %v1672 = vld [vmem:[%s1646 + $0xc] sm:$0xe]
        %v1673 = vld [vmem:[%s1646 + $0x18] sm:$0xe]
        %v1674 = vld [vmem:[%s1646 + $0x24] sm:$0xe]
        %v1675 = vld [vmem:[%s1646 + $0x30] sm:$0xe]
        %v1676 = vld [vmem:[%s1646 + $0x3c] sm:$0xe]
        %v1677 = vld [vmem:[%s1646 + $0x48] sm:$0xe]
        %v1678 = vld [vmem:[%s1646 + $0x54] sm:$0xe]
        %v1695 = vunpack.c.l.b16 %v1647
        %v1696 = vunpack.c.l.b16 %v1648
        %v1697 = vunpack.c.l.b16 %v1649
        %v1698 = vunpack.c.l.b16 %v1650
        %v1699 = vunpack.c.l.b16 %v1651
        %v1700 = vunpack.c.l.b16 %v1652
        %v1701 = vunpack.c.l.b16 %v1653
        %v1702 = vunpack.c.l.b16 %v1654
        %v1703 = vunpack.c.l.b16 %v1655
        %v1704 = vunpack.c.l.b16 %v1656
        %v1705 = vunpack.c.l.b16 %v1657
        %v1706 = vunpack.c.l.b16 %v1658
        %v1707 = vunpack.c.l.b16 %v1659
        %v1708 = vunpack.c.l.b16 %v1660
        %v1709 = vunpack.c.l.b16 %v1661
        %v1710 = vunpack.c.l.b16 %v1662
        %v1711 = vpack.c.b16 %v1696, %v1695
        %v1712 = vpack.c.b16 %v1698, %v1697
        %v1713 = vpack.c.b16 %v1700, %v1699
        %v1714 = vpack.c.b16 %v1702, %v1701
        %v1715 = vpack.c.b16 %v1704, %v1703
        %v1716 = vpack.c.b16 %v1706, %v1705
        %v1717 = vpack.c.b16 %v1708, %v1707
        %v1718 = vpack.c.b16 %v1710, %v1709
        %v1727 = vunpack.c.l.b16 %v1663
        %v1728 = vunpack.c.l.b16 %v1664
        %v1729 = vunpack.c.l.b16 %v1665
        %v1730 = vunpack.c.l.b16 %v1666
        %v1731 = vunpack.c.l.b16 %v1667
        %v1732 = vunpack.c.l.b16 %v1668
        %v1733 = vunpack.c.l.b16 %v1669
        %v1734 = vunpack.c.l.b16 %v1670
        %v1735 = vpack.c.b16 %v1727, %v1727
        %v1736 = vpack.c.b16 %v1728, %v1728
        %v1737 = vpack.c.b16 %v1729, %v1729
        %v1738 = vpack.c.b16 %v1730, %v1730
        %v1739 = vpack.c.b16 %v1731, %v1731
        %v1740 = vpack.c.b16 %v1732, %v1732
        %v1741 = vpack.c.b16 %v1733, %v1733
        %v1742 = vpack.c.b16 %v1734, %v1734
        %v1744 = vshrl.u32 %v1711, 16
        %v1746 = vshll.u32 %v1711, 16
        %v1748 = vrot.slane %v1746, 1
        %v1749 = vor.u32 %v1744, %v1748
        %v1751 = vshll.u32 %v1735, 16
        %v1753 = vrot.slane %v1751, 1
        %v1754 = vsel %vm368, %v1749, %v1753
        %v1756 = vshrl.u32 %v1712, 16
        %v1758 = vshll.u32 %v1712, 16
        %v1760 = vrot.slane %v1758, 1
        %v1761 = vor.u32 %v1756, %v1760
        %v1763 = vshll.u32 %v1736, 16
        %v1765 = vrot.slane %v1763, 1
        %v1766 = vsel %vm368, %v1761, %v1765
        %v1768 = vshrl.u32 %v1713, 16
        %v1770 = vshll.u32 %v1713, 16
        %v1772 = vrot.slane %v1770, 1
        %v1773 = vor.u32 %v1768, %v1772
        %v1775 = vshll.u32 %v1737, 16
        %v1777 = vrot.slane %v1775, 1
        %v1778 = vsel %vm368, %v1773, %v1777
        %v1780 = vshrl.u32 %v1714, 16
        %v1782 = vshll.u32 %v1714, 16
        %v1784 = vrot.slane %v1782, 1
        %v1785 = vor.u32 %v1780, %v1784
        %v1787 = vshll.u32 %v1738, 16
        %v1789 = vrot.slane %v1787, 1
        %v1790 = vsel %vm368, %v1785, %v1789
        %v1792 = vshrl.u32 %v1715, 16
        %v1794 = vshll.u32 %v1715, 16
        %v1796 = vrot.slane %v1794, 1
        %v1797 = vor.u32 %v1792, %v1796
        %v1799 = vshll.u32 %v1739, 16
        %v1801 = vrot.slane %v1799, 1
        %v1802 = vsel %vm368, %v1797, %v1801
        %v1804 = vshrl.u32 %v1716, 16
        %v1806 = vshll.u32 %v1716, 16
        %v1808 = vrot.slane %v1806, 1
        %v1809 = vor.u32 %v1804, %v1808
        %v1811 = vshll.u32 %v1740, 16
        %v1813 = vrot.slane %v1811, 1
        %v1814 = vsel %vm368, %v1809, %v1813
        %v1816 = vshrl.u32 %v1717, 16
        %v1818 = vshll.u32 %v1717, 16
        %v1820 = vrot.slane %v1818, 1
        %v1821 = vor.u32 %v1816, %v1820
        %v1823 = vshll.u32 %v1741, 16
        %v1825 = vrot.slane %v1823, 1
        %v1826 = vsel %vm368, %v1821, %v1825
        %v1828 = vshrl.u32 %v1718, 16
        %v1830 = vshll.u32 %v1718, 16
        %v1832 = vrot.slane %v1830, 1
        %v1833 = vor.u32 %v1828, %v1832
        %v1835 = vshll.u32 %v1742, 16
        %v1837 = vrot.slane %v1835, 1
        %v1838 = vsel %vm368, %v1833, %v1837
        %1839 = vrot.lane.b32.xlu0 %v1754, 8
        %v1840 = vpop.permute.xlu0 %1839
        %1841 = vrot.lane.b32.xlu0 %v1766, 8
        %v1842 = vpop.permute.xlu0 %1841
        %1843 = vrot.lane.b32.xlu0 %v1778, 8
        %v1844 = vpop.permute.xlu0 %1843
        %1845 = vrot.lane.b32.xlu0 %v1790, 8
        %v1846 = vpop.permute.xlu0 %1845
        %1847 = vrot.lane.b32.xlu0 %v1802, 8
        %v1848 = vpop.permute.xlu0 %1847
        %1849 = vrot.lane.b32.xlu0 %v1814, 8
        %v1850 = vpop.permute.xlu0 %1849
        %1851 = vrot.lane.b32.xlu0 %v1826, 8
        %v1852 = vpop.permute.xlu0 %1851
        %1853 = vrot.lane.b32.xlu0 %v1838, 8
        %v1854 = vpop.permute.xlu0 %1853
        %v1863 = vunpack.c.l.b16 %v1671
        %v1864 = vunpack.c.l.b16 %v1672
        %v1865 = vunpack.c.l.b16 %v1673
        %v1866 = vunpack.c.l.b16 %v1674
        %v1867 = vunpack.c.l.b16 %v1675
        %v1868 = vunpack.c.l.b16 %v1676
        %v1869 = vunpack.c.l.b16 %v1677
        %v1870 = vunpack.c.l.b16 %v1678
        %v1871 = vpack.c.b16 %v1696, %v1863
        %v1872 = vpack.c.b16 %v1698, %v1864
        %v1873 = vpack.c.b16 %v1700, %v1865
        %v1874 = vpack.c.b16 %v1702, %v1866
        %v1875 = vpack.c.b16 %v1704, %v1867
        %v1876 = vpack.c.b16 %v1706, %v1868
        %v1877 = vpack.c.b16 %v1708, %v1869
        %v1878 = vpack.c.b16 %v1710, %v1870
        %v1879 = vrot.slane %v1871, 1
        %v1880 = vrot.slane %v1735, 1
        %v1881 = vsel %vm509, %v1879, %v1880
        %v1882 = vrot.slane %v1872, 1
        %v1883 = vrot.slane %v1736, 1
        %v1884 = vsel %vm509, %v1882, %v1883
        %v1885 = vrot.slane %v1873, 1
        %v1886 = vrot.slane %v1737, 1
        %v1887 = vsel %vm509, %v1885, %v1886
        %v1888 = vrot.slane %v1874, 1
        %v1889 = vrot.slane %v1738, 1
        %v1890 = vsel %vm509, %v1888, %v1889
        %v1891 = vrot.slane %v1875, 1
        %v1892 = vrot.slane %v1739, 1
        %v1893 = vsel %vm509, %v1891, %v1892
        %v1894 = vrot.slane %v1876, 1
        %v1895 = vrot.slane %v1740, 1
        %v1896 = vsel %vm509, %v1894, %v1895
        %v1897 = vrot.slane %v1877, 1
        %v1898 = vrot.slane %v1741, 1
        %v1899 = vsel %vm509, %v1897, %v1898
        %v1900 = vrot.slane %v1878, 1
        %v1901 = vrot.slane %v1742, 1
        %v1902 = vsel %vm509, %v1900, %v1901
        %1903 = vrot.lane.b32.xlu0 %v1881, 16
        %v1904 = vpop.permute.xlu0 %1903
        %1905 = vrot.lane.b32.xlu0 %v1884, 16
        %v1906 = vpop.permute.xlu0 %1905
        %1907 = vrot.lane.b32.xlu0 %v1887, 16
        %v1908 = vpop.permute.xlu0 %1907
        %1909 = vrot.lane.b32.xlu0 %v1890, 16
        %v1910 = vpop.permute.xlu0 %1909
        %1911 = vrot.lane.b32.xlu0 %v1893, 16
        %v1912 = vpop.permute.xlu0 %1911
        %1913 = vrot.lane.b32.xlu0 %v1896, 16
        %v1914 = vpop.permute.xlu0 %1913
        %1915 = vrot.lane.b32.xlu0 %v1899, 16
        %v1916 = vpop.permute.xlu0 %1915
        %1917 = vrot.lane.b32.xlu0 %v1902, 16
        %v1918 = vpop.permute.xlu0 %1917
        %v1920 = vsel %vm581, %v1711, %v1840
        %v1922 = vsel %vm581, %v1712, %v1842
        %v1924 = vsel %vm581, %v1713, %v1844
        %v1926 = vsel %vm581, %v1714, %v1846
        %v1928 = vsel %vm581, %v1715, %v1848
        %v1930 = vsel %vm581, %v1716, %v1850
        %v1932 = vsel %vm581, %v1717, %v1852
        %v1934 = vsel %vm581, %v1718, %v1854
        %v1936 = vsel %vm1628, %v1920, %v1904
        %v1938 = vsel %vm1628, %v1922, %v1906
        %v1940 = vsel %vm1628, %v1924, %v1908
        %v1942 = vsel %vm1628, %v1926, %v1910
        %v1944 = vsel %vm1628, %v1928, %v1912
        %v1946 = vsel %vm1628, %v1930, %v1914
        %v1948 = vsel %vm1628, %v1932, %v1916
        %v1950 = vsel %vm1628, %v1934, %v1918
        %s1951 = scalar_lea.vmem %s3, 4
        %v1952 = vld [vmem:[%s1951] sm:$0xf]
        %vm1953 = vcmask 195584
        %v1955 = vsel %vm1953, %v1952, 0
        %v1957 = vsel %vm1953, %v1936, 0
        %v1959 = vsel %vm1953, %v1938, 0
        %v1961 = vsel %vm1953, %v1940, 0
        %v1963 = vsel %vm1953, %v1942, 0
        %v1965 = vsel %vm1953, %v1944, 0
        %v1967 = vsel %vm1953, %v1946, 0
        %v1969 = vsel %vm1953, %v1948, 0
        %v1971 = vsel %vm1953, %v1950, 0
        %1973 = vmatpush.bf16.xpose.msra.mxu0 %v1971
        %1974 = vmatpush.bf16.xpose.msra.mxu0 %v1969
        %1975 = vmatpush.bf16.xpose.msra.mxu0 %v1967
        %1976 = vmatpush.bf16.xpose.msra.mxu0 %v1965
        %1977 = vmatpush.bf16.xpose.msra.mxu0 %v1963
        %1978 = vmatpush.bf16.xpose.msra.mxu0 %v1961
        %1979 = vmatpush.bf16.xpose.msra.mxu0 %v1959
        %1980 = vmatpush.bf16.xpose.msra.mxu0 %v1957
        %1981 = vmatmul.bf16.gmra.mxu0 %v1955
        %v1982 = vpop.f32.mrf.mxu0
        %v1983 = vadd.f32 0.0, %v1982
        %v1984 = vpop.f32.mrf.mxu0
        %1985 = vdwg.mxu0
        %v1987 = vsel %vm1953, %v1645, 0
        %v1989 = vsel %vm1953, %v1630, 0
        %v1991 = vsel %vm1953, %v1632, 0
        %v1993 = vsel %vm1953, %v1634, 0
        %v1995 = vsel %vm1953, %v1636, 0
        %v1997 = vsel %vm1953, %v1638, 0
        %v1999 = vsel %vm1953, %v1640, 0
        %v2001 = vsel %vm1953, %v1642, 0
        %v2003 = vsel %vm1953, %v1644, 0
        %2005 = vmatpush.bf16.xpose.msra.mxu0 %v2003
        %2006 = vmatpush.bf16.xpose.msra.mxu0 %v2001
        %2007 = vmatpush.bf16.xpose.msra.mxu0 %v1999
        %2008 = vmatpush.bf16.xpose.msra.mxu0 %v1997
        %2009 = vmatpush.bf16.xpose.msra.mxu0 %v1995
        %2010 = vmatpush.bf16.xpose.msra.mxu0 %v1993
        %2011 = vmatpush.bf16.xpose.msra.mxu0 %v1991
        %2012 = vmatpush.bf16.xpose.msra.mxu0 %v1989
        %2013 = vmatmul.bf16.gmra.mxu0 %v1987
        %v2014 = vpop.f32.mrf.mxu0
        %v2015 = vadd.f32 %v1983, %v2014
        %v2016 = vpop.f32.mrf.mxu0
        %2017 = vdwg.mxu0
        %s2018 = scalar_lea.vmem [#allocation2], 24
        %v2019 = vld [vmem:[%s2018] sm:$0xf]
        %v2020 = vld [vmem:[%s2018 + $0x4] sm:$0xf]
        %v2021 = vld [vmem:[%s2018 + $0xc] sm:$0xf]
        %v2022 = vld [vmem:[%s2018 + $0x10] sm:$0xf]
        %v2023 = vld [vmem:[%s2018 + $0x18] sm:$0xf]
        %v2024 = vld [vmem:[%s2018 + $0x1c] sm:$0xf]
        %v2025 = vld [vmem:[%s2018 + $0x24] sm:$0xf]
        %v2026 = vld [vmem:[%s2018 + $0x28] sm:$0xf]
        %v2027 = vld [vmem:[%s2018 + $0x30] sm:$0xf]
        %v2028 = vld [vmem:[%s2018 + $0x34] sm:$0xf]
        %v2029 = vld [vmem:[%s2018 + $0x3c] sm:$0xf]
        %v2030 = vld [vmem:[%s2018 + $0x40] sm:$0xf]
        %v2031 = vld [vmem:[%s2018 + $0x48] sm:$0xf]
        %v2032 = vld [vmem:[%s2018 + $0x4c] sm:$0xf]
        %v2033 = vld [vmem:[%s2018 + $0x54] sm:$0xf]
        %v2034 = vld [vmem:[%s2018 + $0x58] sm:$0xf]
        %v2035 = vld [vmem:[%s2018 + $0x8] sm:$0x1]
        %v2036 = vld [vmem:[%s2018 + $0x14] sm:$0x1]
        %v2037 = vld [vmem:[%s2018 + $0x20] sm:$0x1]
        %v2038 = vld [vmem:[%s2018 + $0x2c] sm:$0x1]
        %v2039 = vld [vmem:[%s2018 + $0x38] sm:$0x1]
        %v2040 = vld [vmem:[%s2018 + $0x44] sm:$0x1]
        %v2041 = vld [vmem:[%s2018 + $0x50] sm:$0x1]
        %v2042 = vld [vmem:[%s2018 + $0x5c] sm:$0x1]
        %v2043 = vld [vmem:[%s2018] sm:$0xe]
        %v2044 = vld [vmem:[%s2018 + $0xc] sm:$0xe]
        %v2045 = vld [vmem:[%s2018 + $0x18] sm:$0xe]
        %v2046 = vld [vmem:[%s2018 + $0x24] sm:$0xe]
        %v2047 = vld [vmem:[%s2018 + $0x30] sm:$0xe]
        %v2048 = vld [vmem:[%s2018 + $0x3c] sm:$0xe]
        %v2049 = vld [vmem:[%s2018 + $0x48] sm:$0xe]
        %v2050 = vld [vmem:[%s2018 + $0x54] sm:$0xe]
        %v2067 = vunpack.c.l.b16 %v2019
        %v2068 = vunpack.c.l.b16 %v2020
        %v2069 = vunpack.c.l.b16 %v2021
        %v2070 = vunpack.c.l.b16 %v2022
        %v2071 = vunpack.c.l.b16 %v2023
        %v2072 = vunpack.c.l.b16 %v2024
        %v2073 = vunpack.c.l.b16 %v2025
        %v2074 = vunpack.c.l.b16 %v2026
        %v2075 = vunpack.c.l.b16 %v2027
        %v2076 = vunpack.c.l.b16 %v2028
        %v2077 = vunpack.c.l.b16 %v2029
        %v2078 = vunpack.c.l.b16 %v2030
        %v2079 = vunpack.c.l.b16 %v2031
        %v2080 = vunpack.c.l.b16 %v2032
        %v2081 = vunpack.c.l.b16 %v2033
        %v2082 = vunpack.c.l.b16 %v2034
        %v2083 = vpack.c.b16 %v2068, %v2067
        %v2084 = vpack.c.b16 %v2070, %v2069
        %v2085 = vpack.c.b16 %v2072, %v2071
        %v2086 = vpack.c.b16 %v2074, %v2073
        %v2087 = vpack.c.b16 %v2076, %v2075
        %v2088 = vpack.c.b16 %v2078, %v2077
        %v2089 = vpack.c.b16 %v2080, %v2079
        %v2090 = vpack.c.b16 %v2082, %v2081
        %v2099 = vunpack.c.l.b16 %v2035
        %v2100 = vunpack.c.l.b16 %v2036
        %v2101 = vunpack.c.l.b16 %v2037
        %v2102 = vunpack.c.l.b16 %v2038
        %v2103 = vunpack.c.l.b16 %v2039
        %v2104 = vunpack.c.l.b16 %v2040
        %v2105 = vunpack.c.l.b16 %v2041
        %v2106 = vunpack.c.l.b16 %v2042
        %v2107 = vpack.c.b16 %v2099, %v2099
        %v2108 = vpack.c.b16 %v2100, %v2100
        %v2109 = vpack.c.b16 %v2101, %v2101
        %v2110 = vpack.c.b16 %v2102, %v2102
        %v2111 = vpack.c.b16 %v2103, %v2103
        %v2112 = vpack.c.b16 %v2104, %v2104
        %v2113 = vpack.c.b16 %v2105, %v2105
        %v2114 = vpack.c.b16 %v2106, %v2106
        %v2116 = vshrl.u32 %v2083, 16
        %v2118 = vshll.u32 %v2083, 16
        %v2120 = vrot.slane %v2118, 1
        %v2121 = vor.u32 %v2116, %v2120
        %v2123 = vshll.u32 %v2107, 16
        %v2125 = vrot.slane %v2123, 1
        %v2126 = vsel %vm368, %v2121, %v2125
        %v2128 = vshrl.u32 %v2084, 16
        %v2130 = vshll.u32 %v2084, 16
        %v2132 = vrot.slane %v2130, 1
        %v2133 = vor.u32 %v2128, %v2132
        %v2135 = vshll.u32 %v2108, 16
        %v2137 = vrot.slane %v2135, 1
        %v2138 = vsel %vm368, %v2133, %v2137
        %v2140 = vshrl.u32 %v2085, 16
        %v2142 = vshll.u32 %v2085, 16
        %v2144 = vrot.slane %v2142, 1
        %v2145 = vor.u32 %v2140, %v2144
        %v2147 = vshll.u32 %v2109, 16
        %v2149 = vrot.slane %v2147, 1
        %v2150 = vsel %vm368, %v2145, %v2149
        %v2152 = vshrl.u32 %v2086, 16
        %v2154 = vshll.u32 %v2086, 16
        %v2156 = vrot.slane %v2154, 1
        %v2157 = vor.u32 %v2152, %v2156
        %v2159 = vshll.u32 %v2110, 16
        %v2161 = vrot.slane %v2159, 1
        %v2162 = vsel %vm368, %v2157, %v2161
        %v2164 = vshrl.u32 %v2087, 16
        %v2166 = vshll.u32 %v2087, 16
        %v2168 = vrot.slane %v2166, 1
        %v2169 = vor.u32 %v2164, %v2168
        %v2171 = vshll.u32 %v2111, 16
        %v2173 = vrot.slane %v2171, 1
        %v2174 = vsel %vm368, %v2169, %v2173
        %v2176 = vshrl.u32 %v2088, 16
        %v2178 = vshll.u32 %v2088, 16
        %v2180 = vrot.slane %v2178, 1
        %v2181 = vor.u32 %v2176, %v2180
        %v2183 = vshll.u32 %v2112, 16
        %v2185 = vrot.slane %v2183, 1
        %v2186 = vsel %vm368, %v2181, %v2185
        %v2188 = vshrl.u32 %v2089, 16
        %v2190 = vshll.u32 %v2089, 16
        %v2192 = vrot.slane %v2190, 1
        %v2193 = vor.u32 %v2188, %v2192
        %v2195 = vshll.u32 %v2113, 16
        %v2197 = vrot.slane %v2195, 1
        %v2198 = vsel %vm368, %v2193, %v2197
        %v2200 = vshrl.u32 %v2090, 16
        %v2202 = vshll.u32 %v2090, 16
        %v2204 = vrot.slane %v2202, 1
        %v2205 = vor.u32 %v2200, %v2204
        %v2207 = vshll.u32 %v2114, 16
        %v2209 = vrot.slane %v2207, 1
        %v2210 = vsel %vm368, %v2205, %v2209
        %2211 = vrot.lane.b32.xlu0 %v2126, 8
        %v2212 = vpop.permute.xlu0 %2211
        %2213 = vrot.lane.b32.xlu0 %v2138, 8
        %v2214 = vpop.permute.xlu0 %2213
        %2215 = vrot.lane.b32.xlu0 %v2150, 8
        %v2216 = vpop.permute.xlu0 %2215
        %2217 = vrot.lane.b32.xlu0 %v2162, 8
        %v2218 = vpop.permute.xlu0 %2217
        %2219 = vrot.lane.b32.xlu0 %v2174, 8
        %v2220 = vpop.permute.xlu0 %2219
        %2221 = vrot.lane.b32.xlu0 %v2186, 8
        %v2222 = vpop.permute.xlu0 %2221
        %2223 = vrot.lane.b32.xlu0 %v2198, 8
        %v2224 = vpop.permute.xlu0 %2223
        %2225 = vrot.lane.b32.xlu0 %v2210, 8
        %v2226 = vpop.permute.xlu0 %2225
        %v2235 = vunpack.c.l.b16 %v2043
        %v2236 = vunpack.c.l.b16 %v2044
        %v2237 = vunpack.c.l.b16 %v2045
        %v2238 = vunpack.c.l.b16 %v2046
        %v2239 = vunpack.c.l.b16 %v2047
        %v2240 = vunpack.c.l.b16 %v2048
        %v2241 = vunpack.c.l.b16 %v2049
        %v2242 = vunpack.c.l.b16 %v2050
        %v2243 = vpack.c.b16 %v2068, %v2235
        %v2244 = vpack.c.b16 %v2070, %v2236
        %v2245 = vpack.c.b16 %v2072, %v2237
        %v2246 = vpack.c.b16 %v2074, %v2238
        %v2247 = vpack.c.b16 %v2076, %v2239
        %v2248 = vpack.c.b16 %v2078, %v2240
        %v2249 = vpack.c.b16 %v2080, %v2241
        %v2250 = vpack.c.b16 %v2082, %v2242
        %v2251 = vrot.slane %v2243, 1
        %v2252 = vrot.slane %v2107, 1
        %v2253 = vsel %vm509, %v2251, %v2252
        %v2254 = vrot.slane %v2244, 1
        %v2255 = vrot.slane %v2108, 1
        %v2256 = vsel %vm509, %v2254, %v2255
        %v2257 = vrot.slane %v2245, 1
        %v2258 = vrot.slane %v2109, 1
        %v2259 = vsel %vm509, %v2257, %v2258
        %v2260 = vrot.slane %v2246, 1
        %v2261 = vrot.slane %v2110, 1
        %v2262 = vsel %vm509, %v2260, %v2261
        %v2263 = vrot.slane %v2247, 1
        %v2264 = vrot.slane %v2111, 1
        %v2265 = vsel %vm509, %v2263, %v2264
        %v2266 = vrot.slane %v2248, 1
        %v2267 = vrot.slane %v2112, 1
        %v2268 = vsel %vm509, %v2266, %v2267
        %v2269 = vrot.slane %v2249, 1
        %v2270 = vrot.slane %v2113, 1
        %v2271 = vsel %vm509, %v2269, %v2270
        %v2272 = vrot.slane %v2250, 1
        %v2273 = vrot.slane %v2114, 1
        %v2274 = vsel %vm509, %v2272, %v2273
        %2275 = vrot.lane.b32.xlu0 %v2253, 16
        %v2276 = vpop.permute.xlu0 %2275
        %2277 = vrot.lane.b32.xlu0 %v2256, 16
        %v2278 = vpop.permute.xlu0 %2277
        %2279 = vrot.lane.b32.xlu0 %v2259, 16
        %v2280 = vpop.permute.xlu0 %2279
        %2281 = vrot.lane.b32.xlu0 %v2262, 16
        %v2282 = vpop.permute.xlu0 %2281
        %2283 = vrot.lane.b32.xlu0 %v2265, 16
        %v2284 = vpop.permute.xlu0 %2283
        %2285 = vrot.lane.b32.xlu0 %v2268, 16
        %v2286 = vpop.permute.xlu0 %2285
        %2287 = vrot.lane.b32.xlu0 %v2271, 16
        %v2288 = vpop.permute.xlu0 %2287
        %2289 = vrot.lane.b32.xlu0 %v2274, 16
        %v2290 = vpop.permute.xlu0 %2289
        %v2292 = vsel %vm581, %v2083, %v2212
        %v2294 = vsel %vm581, %v2084, %v2214
        %v2296 = vsel %vm581, %v2085, %v2216
        %v2298 = vsel %vm581, %v2086, %v2218
        %v2300 = vsel %vm581, %v2087, %v2220
        %v2302 = vsel %vm581, %v2088, %v2222
        %v2304 = vsel %vm581, %v2089, %v2224
        %v2306 = vsel %vm581, %v2090, %v2226
        %v2308 = vsel %vm1628, %v2292, %v2276
        %v2310 = vsel %vm1628, %v2294, %v2278
        %v2312 = vsel %vm1628, %v2296, %v2280
        %v2314 = vsel %vm1628, %v2298, %v2282
        %v2316 = vsel %vm1628, %v2300, %v2284
        %v2318 = vsel %vm1628, %v2302, %v2286
        %v2320 = vsel %vm1628, %v2304, %v2288
        %v2322 = vsel %vm1628, %v2306, %v2290
        %s2323 = scalar_lea.vmem %s3, 8
        %v2324 = vld [vmem:[%s2323] sm:$0xf]
        %v2326 = vsel %vm1953, %v2324, 0
        %v2328 = vsel %vm1953, %v2308, 0
        %v2330 = vsel %vm1953, %v2310, 0
        %v2332 = vsel %vm1953, %v2312, 0
        %v2334 = vsel %vm1953, %v2314, 0
        %v2336 = vsel %vm1953, %v2316, 0
        %v2338 = vsel %vm1953, %v2318, 0
        %v2340 = vsel %vm1953, %v2320, 0
        %v2342 = vsel %vm1953, %v2322, 0
        %2344 = vmatpush.bf16.xpose.msra.mxu0 %v2342
        %2345 = vmatpush.bf16.xpose.msra.mxu0 %v2340
        %2346 = vmatpush.bf16.xpose.msra.mxu0 %v2338
        %2347 = vmatpush.bf16.xpose.msra.mxu0 %v2336
        %2348 = vmatpush.bf16.xpose.msra.mxu0 %v2334
        %2349 = vmatpush.bf16.xpose.msra.mxu0 %v2332
        %2350 = vmatpush.bf16.xpose.msra.mxu0 %v2330
        %2351 = vmatpush.bf16.xpose.msra.mxu0 %v2328
        %2352 = vmatmul.bf16.gmra.mxu0 %v2326
        %v2353 = vpop.f32.mrf.mxu0
        %v2354 = vadd.f32 0.0, %v2353
        %v2355 = vpop.f32.mrf.mxu0
        %2356 = vdwg.mxu0
        %v2357 = vadd.f32 %v2015, %v2354
        %v2358 = vld [vmem:[%s4] sm:$0xff]
        %2360 = vset.pattern.permute.xlu0 0
        %2361 = vperm.xlu0 %2360, %v2358
        %v2362 = vpop.permute.xlu0 %2361
        %v2364 = vadd.f32 %v2357, %v2362
        %v2365 = vmax.f32 %v2364, 0.0
        %2366 = vst [vmem:[%s241] sm:$0xff] %v2365
        %s2367 = sand.u32 %s155, 1
        %s2368 = scalar_lea.sflag [#allocation4], %s2367
        %s2369 = sand.u32 %s155, 1
        %s2370 = smul.addr %s2369, 8
        %s2371 = scalar_lea.vmem [#allocation3], %s2370
        // Predicated region
        $region49: #{tpu_custom_call.1} parent=39 // pred_check
          %p2372 = pneg %p165
        $region50: #{tpu_custom_call.1} parent=39 // pred_check_branch
          %2374 = sbr.rel (%p2372) target = $region52
        $region51: #{tpu_custom_call.1} parent=39 // pred_region
          %2376 = vsyncadd %s2368, 0
          %s2377 = smul.addr %s23, 2
          %s2378 = sadd.s32 %s24, %s2377
          %s2379 = smul.addr %s2378, 8
          %s2380 = scalar_lea.hbm %s5, %s2379
          %s2382 = sshll.u32 %s2371, 4
          %s2383 = int_to_ptr.vmem [resolvable:$true] %s2382
          %s2384 = sshll.u32 %s2380, 4
          %s2385 = int_to_ptr.hbm [resolvable:$true] %s2384
          %2387 = dma.vmem_to_hbm [thread:$0]  %s2383, 128, %s2385, %s2368
        $region52: #{tpu_custom_call.1} parent=39 // pred_fallthru
          _
      $region40: #{tpu_custom_call.1} parent=5 // pred_fallthru
        _
      %p2388 = scmp.le.s32.totalorder 2, %s14
      // Predicated region
      $region53: #{tpu_custom_call.1} parent=5 // pred_check
        %p2389 = pneg %p2388
      $region54: #{tpu_custom_call.1} parent=5 // pred_check_branch
        %2391 = sbr.rel (%p2389) target = $region56
      $region55: #{tpu_custom_call.1} parent=5 // pred_region
        %s2392 = ssub.s32 %s14, 2
        // Predicated region
        $region57: #{tpu_custom_call.1} parent=55 // pred_check
          %p2393 = pneg %p171
        $region58: #{tpu_custom_call.1} parent=55 // pred_check_branch
          %2395 = sbr.rel (%p2393) target = $region60
        $region59: #{tpu_custom_call.1} parent=55 // pred_region
          %s2396 = sand.u32 %s156, 1
          %s2397 = scalar_lea.sflag [#allocation4], %s2396
          %s2398 = sand.u32 %s156, 1
          %s2399 = smul.addr %s2398, 8
          %s2400 = scalar_lea.vmem [#allocation3], %s2399
          %2402 = dma.done %s2397, 128
        $region60: #{tpu_custom_call.1} parent=55 // pred_fallthru
          _
      $region56: #{tpu_custom_call.1} parent=5 // pred_fallthru
        _
    $region6: #{tpu_custom_call.1} parent=1 // loop_footer
      %s18 = sadd.s32 1, %s14
    $region7: #{tpu_custom_call.1} parent=1 // loop_footer_branch
      %13 = sbr.rel target = $region3
    $region8: #{tpu_custom_call.1} parent=1 // loop_exit
      _
    %2403 = vsyncpa [#allocation4], 1
    %s2404 = scalar_lea.sflag [#allocation4], 1
    %2405 = vsyncpa %s2404, 1

</llo_original>
